<compile_context>
chip_gen: v7x
topology: tpu7x:2x2x1
jax: 0.10.0
libtpu: 0.0.40
codegen_flags: <defaults>
</compile_context>

<pallas_src>
import functools

import jax
import jax.numpy as jnp
from jax import lax
from jax.experimental import pallas as pl
from jax.experimental.pallas import tpu as pltpu


# ----------------------------------------------------------------------------
# Fused Pallas kernel: GATConv -> LayerNorm/ELU -> GATConv -> LayerNorm
# ----------------------------------------------------------------------------
def gat_fused_kernel(x_ref, adj_ref,
                     w1_ref, att1_ref, b1_ref, g1_ref, beta1_ref,
                     w2_ref, att2_ref, b2_ref, g2_ref, beta2_ref,
                     out_ref, alpha_ref,
                     *, heads1, ch1, heads2, ch2, neg_slope, eps):
    adj = adj_ref[...]                                                 # [N, N]
    neg_inf = jnp.float32(-1e30)

    def gat_conv(feat, w, att_mat, heads, out_ch):
        # Linear transform + all-head attention scores, both on the MXU.
        h = jnp.dot(feat, w, preferred_element_type=jnp.float32)        # [N, H*C]
        scores = jnp.dot(h, att_mat, preferred_element_type=jnp.float32)  # [N, 2H]
        head_outs, head_attn = [], []
        for hd in range(heads):                                         # static, small
            hh = h[:, hd * out_ch:(hd + 1) * out_ch]                    # [N, C]
            # e[i, j] = alpha_dst[i] + alpha_src[j]  (row i = target node)
            e = scores[:, heads + hd][:, None] + scores[:, hd][None, :]  # [N, N]
            e = jnp.where(e > 0, e, neg_slope * e)                      # LeakyReLU(0.2)
            e = jnp.where(adj > 0, e, neg_inf)                          # mask non-edges
            e = e - jnp.max(e, axis=1, keepdims=True)
            p = jnp.exp(e)                                              # masked -> 0
            denom = jnp.sum(p, axis=1, keepdims=True)                   # >= 1 (self loop)
            attn = p * pl.reciprocal(denom, approx=True)                # EUP divide
            head_attn.append(attn)
            head_outs.append(jnp.dot(attn, hh,
                                     preferred_element_type=jnp.float32))  # [N, C]
        return head_outs, head_attn

    def layer_norm(y, gamma, beta, apply_elu):
        mu = jnp.mean(y, axis=1, keepdims=True)
        yc = y - mu
        var = jnp.mean(yc * yc, axis=1, keepdims=True)
        z = yc * lax.rsqrt(var + eps) * gamma + beta
        if apply_elu:
            z = jnp.where(z > 0, z, jnp.exp(jnp.minimum(z, 0.0)) - 1.0)
        return z

    # ---- layer 1: GATConv (concat=True) -> LayerNorm -> ELU ----
    outs1, _ = gat_conv(x_ref[...], w1_ref[...], att1_ref[...], heads1, ch1)
    y1 = jnp.concatenate(outs1, axis=1) + b1_ref[...]      # full-width, stays in vregs
    y1 = layer_norm(y1, g1_ref[...], beta1_ref[...], apply_elu=True)

    # ---- layer 2: GATConv (concat=False, mean over heads) -> LayerNorm ----
    outs2, attn2 = gat_conv(y1, w2_ref[...], att2_ref[...], heads2, ch2)
    y2 = outs2[0]
    for hd in range(1, heads2):
        y2 = y2 + outs2[hd]
    y2 = y2 * (1.0 / heads2) + b2_ref[...]
    out_ref[...] = layer_norm(y2, g2_ref[...], beta2_ref[...], apply_elu=False)
    for hd in range(heads2):
        alpha_ref[hd] = attn2[hd]                           # full-row stores


# ----------------------------------------------------------------------------
# Wrapper
# ----------------------------------------------------------------------------
_VMEM = pl.BlockSpec(memory_space=pltpu.MemorySpace.VMEM)


def _block_att_matrix(a_src, a_dst):
    """[H, C] src/dst attention vectors -> block-diagonal [H*C, 2H] matrix so
    that h @ mat yields [alpha_src_0..H-1 | alpha_dst_0..H-1] for all heads in
    a single MXU matmul."""
    heads, c = a_src.shape
    eye = jnp.eye(heads, dtype=a_src.dtype)
    src = (a_src[:, :, None] * eye[:, None, :]).reshape(heads * c, heads)
    dst = (a_dst[:, :, None] * eye[:, None, :]).reshape(heads * c, heads)
    return jnp.concatenate([src, dst], axis=1)


def gat_forward(x, adj, params, cfg):
    n = x.shape[0]
    h1, c1 = cfg['n_head'], cfg['n_hid']
    h2, c2 = cfg['n_head_last'], cfg['n_class']
    att1 = _block_att_matrix(params['in_asrc'], params['in_adst'])
    att2 = _block_att_matrix(params['out_asrc'], params['out_adst'])
    kernel = functools.partial(gat_fused_kernel, heads1=h1, ch1=c1,
                               heads2=h2, ch2=c2, neg_slope=0.2, eps=1e-5)
    out, alpha = pl.pallas_call(
        kernel,
        out_shape=(jax.ShapeDtypeStruct((n, c2), jnp.float32),
                   jax.ShapeDtypeStruct((h2, n, n), jnp.float32)),
        in_specs=[_VMEM] * 12,
        out_specs=(_VMEM, _VMEM),
    )(x, adj,
      params['in_w'], att1, params['in_bias'].reshape(1, -1),
      params['in_gamma'].reshape(1, -1), params['in_beta'].reshape(1, -1),
      params['out_w'], att2, params['out_bias'].reshape(1, -1),
      params['out_gamma'].reshape(1, -1), params['out_beta'].reshape(1, -1))
    # F.dropout is identity in eval mode (training=False).
    # TODO(synk): reference GATConv (PyG/SuperGAT) stores per-edge alpha_; here
    # alpha_ is returned as dense per-head attention matrices [H_last, N, N].
    return out, [], alpha


# ----------------------------------------------------------------------------
# Main
# ----------------------------------------------------------------------------
if __name__ == "__main__":
    cfg = dict(task='Transductive', num_layer=2, norm='LayerNorm',
               n_feat=16, n_hid=8, n_head=4, n_head_last=2, n_class=4,
               dropout=0.5, n_layer_dropout=0.0, att_type='GAT')
    N = 16  # number of graph nodes

    key = jax.random.PRNGKey(0)
    ks = jax.random.split(key, 10)

    def glorot(k, shape):
        fan_in, fan_out = shape[0], shape[-1]
        lim = (6.0 / (fan_in + fan_out)) ** 0.5
        return jax.random.uniform(k, shape, jnp.float32, -lim, lim)

    H, C = cfg['n_head'], cfg['n_hid']
    HL, NC = cfg['n_head_last'], cfg['n_class']
    params = {
        # in conv: n_feat -> n_hid per head, concat=True
        'in_w':    glorot(ks[0], (cfg['n_feat'], H * C)),
        'in_asrc': glorot(ks[1], (H, C)),
        'in_adst': glorot(ks[2], (H, C)),
        'in_bias': jnp.zeros((H * C,), jnp.float32),
        'in_gamma': jnp.ones((H * C,), jnp.float32),
        'in_beta':  jnp.zeros((H * C,), jnp.float32),
        # out conv: n_hid*n_head -> n_class per head, concat=False (mean)
        'out_w':    glorot(ks[3], (H * C, HL * NC)),
        'out_asrc': glorot(ks[4], (HL, NC)),
        'out_adst': glorot(ks[5], (HL, NC)),
        'out_bias': jnp.zeros((NC,), jnp.float32),
        'out_gamma': jnp.ones((NC,), jnp.float32),
        'out_beta':  jnp.zeros((NC,), jnp.float32),
    }

    # Node features
    x = jax.random.normal(ks[6], (N, cfg['n_feat']), jnp.float32)

    # Deterministic graph: ring + skip edges, both directions. edge_index[0]=src, [1]=dst.
    src = jnp.concatenate([jnp.arange(N), jnp.arange(N),
                           (jnp.arange(N) + 1) % N, (jnp.arange(N) + 3) % N])
    dst = jnp.concatenate([(jnp.arange(N) + 1) % N, (jnp.arange(N) + 3) % N,
                           jnp.arange(N), jnp.arange(N)])
    edge_index = jnp.stack([src, dst]).astype(jnp.int32)

    # Dense adjacency mask adj[i, j] = 1 iff edge j -> i; add self loops.
    adj = jnp.zeros((N, N), jnp.float32)
    adj = adj.at[edge_index[1], edge_index[0]].set(1.0)
    adj = adj.at[jnp.arange(N), jnp.arange(N)].set(1.0)

    fwd = jax.jit(functools.partial(gat_forward, cfg=cfg))
    out, empty_list, alpha = fwd(x, adj, params)
    jax.block_until_ready(out)
    jax.block_until_ready(alpha)

    assert out.shape == (N, cfg['n_class'])
    assert alpha.shape == (cfg['n_head_last'], N, N)
    assert bool(jnp.all(jnp.isfinite(out)))
    assert bool(jnp.all(jnp.isfinite(alpha)))
    print("KERNEL_OK")
</pallas_src>

<mosaic_0001>
module attributes {stable_mosaic.version = 11 : i64} {
  func.func @gat_fused_kernel(%arg0: memref<16x16xf32, #tpu.memory_space<vmem>>, %arg1: memref<16x16xf32, #tpu.memory_space<vmem>>, %arg2: memref<16x32xf32, #tpu.memory_space<vmem>>, %arg3: memref<32x8xf32, #tpu.memory_space<vmem>>, %arg4: memref<1x32xf32, #tpu.memory_space<vmem>>, %arg5: memref<1x32xf32, #tpu.memory_space<vmem>>, %arg6: memref<1x32xf32, #tpu.memory_space<vmem>>, %arg7: memref<32x8xf32, #tpu.memory_space<vmem>>, %arg8: memref<8x4xf32, #tpu.memory_space<vmem>>, %arg9: memref<1x4xf32, #tpu.memory_space<vmem>>, %arg10: memref<1x4xf32, #tpu.memory_space<vmem>>, %arg11: memref<1x4xf32, #tpu.memory_space<vmem>>, %arg12: memref<16x4xf32, #tpu.memory_space<vmem>>, %arg13: memref<2x16x16xf32, #tpu.memory_space<vmem>>) attributes {dimension_semantics = [], scalar_prefetch = 0 : i64, scratch_operands = 0 : i64, tpu.core_type = #tpu.core_type<tc>} {
    %c0 = arith.constant 0 : index
    %c0_0 = arith.constant 0 : index
    %0 = vector.load %arg1[%c0, %c0_0] : memref<16x16xf32, #tpu.memory_space<vmem>>, vector<16x16xf32>
    %c0_1 = arith.constant 0 : index
    %c0_2 = arith.constant 0 : index
    %1 = vector.load %arg0[%c0_1, %c0_2] : memref<16x16xf32, #tpu.memory_space<vmem>>, vector<16x16xf32>
    %c0_3 = arith.constant 0 : index
    %c0_4 = arith.constant 0 : index
    %2 = vector.load %arg2[%c0_3, %c0_4] : memref<16x32xf32, #tpu.memory_space<vmem>>, vector<16x32xf32>
    %c0_5 = arith.constant 0 : index
    %c0_6 = arith.constant 0 : index
    %3 = vector.load %arg3[%c0_5, %c0_6] : memref<32x8xf32, #tpu.memory_space<vmem>>, vector<32x8xf32>
    %cst = arith.constant dense<0.000000e+00> : vector<16x32xf32>
    %4 = tpu.matmul %1, %2, %cst {dimension_numbers = #tpu.dot_dimension_numbers<[1], [0], [0], [1], [0, 0, 1, 1], [], []>} : vector<16x16xf32>, vector<16x32xf32>, vector<16x32xf32> -> vector<16x32xf32>
    %cst_7 = arith.constant dense<0.000000e+00> : vector<16x8xf32>
    %5 = tpu.matmul %4, %3, %cst_7 {dimension_numbers = #tpu.dot_dimension_numbers<[1], [0], [0], [1], [0, 0, 1, 1], [], []>} : vector<16x32xf32>, vector<32x8xf32>, vector<16x8xf32> -> vector<16x8xf32>
    %6 = vector.extract_strided_slice %4 {offsets = [0, 0], sizes = [16, 8], strides = [1, 1]} : vector<16x32xf32> to vector<16x8xf32>
    %7 = vector.extract_strided_slice %5 {offsets = [0, 4], sizes = [16, 1], strides = [1, 1]} : vector<16x8xf32> to vector<16x1xf32>
    %8 = vector.shape_cast %7 : vector<16x1xf32> to vector<16xf32>
    %9 = vector.shape_cast %8 : vector<16xf32> to vector<16x1xf32>
    %10 = vector.extract_strided_slice %5 {offsets = [0, 0], sizes = [16, 1], strides = [1, 1]} : vector<16x8xf32> to vector<16x1xf32>
    %11 = vector.shape_cast %10 : vector<16x1xf32> to vector<16xf32>
    %12 = vector.shape_cast %11 : vector<16xf32> to vector<1x16xf32>
    %13 = vector.broadcast %9 : vector<16x1xf32> to vector<16x16xf32>
    %14 = vector.broadcast %12 : vector<1x16xf32> to vector<16x16xf32>
    %15 = arith.addf %13, %14 : vector<16x16xf32>
    %cst_8 = arith.constant 0.000000e+00 : f32
    %16 = vector.broadcast %cst_8 : f32 to vector<16x16xf32>
    %17 = arith.cmpf ogt, %15, %16 : vector<16x16xf32>
    %cst_9 = arith.constant 2.000000e-01 : f32
    %18 = vector.broadcast %cst_9 : f32 to vector<16x16xf32>
    %19 = arith.mulf %18, %15 : vector<16x16xf32>
    %20 = arith.select %17, %15, %19 : vector<16x16xi1>, vector<16x16xf32>
    %cst_10 = arith.constant 0.000000e+00 : f32
    %21 = vector.broadcast %cst_10 : f32 to vector<16x16xf32>
    %22 = arith.cmpf ogt, %0, %21 : vector<16x16xf32>
    %cst_11 = arith.constant -1.000000e+30 : f32
    %23 = vector.broadcast %cst_11 : f32 to vector<16x16xf32>
    %24 = arith.select %22, %20, %23 : vector<16x16xi1>, vector<16x16xf32>
    %cst_12 = arith.constant dense<0xFF800000> : vector<16xf32>
    %25 = vector.multi_reduction <maximumf>, %24, %cst_12 [1] : vector<16x16xf32> to vector<16xf32>
    %26 = vector.shape_cast %25 : vector<16xf32> to vector<16x1xf32>
    %27 = vector.broadcast %26 : vector<16x1xf32> to vector<16x16xf32>
    %28 = arith.subf %24, %27 : vector<16x16xf32>
    %29 = math.exp %28 : vector<16x16xf32>
    %cst_13 = arith.constant dense<0.000000e+00> : vector<16xf32>
    %30 = vector.multi_reduction <add>, %29, %cst_13 [1] : vector<16x16xf32> to vector<16xf32>
    %31 = vector.shape_cast %30 : vector<16xf32> to vector<16x1xf32>
    %32 = tpu.reciprocal %31 {approx = true} : vector<16x1xf32> -> vector<16x1xf32>
    %33 = vector.broadcast %32 : vector<16x1xf32> to vector<16x16xf32>
    %34 = arith.mulf %29, %33 : vector<16x16xf32>
    %cst_14 = arith.constant dense<0.000000e+00> : vector<16x8xf32>
    %35 = tpu.matmul %34, %6, %cst_14 {dimension_numbers = #tpu.dot_dimension_numbers<[1], [0], [0], [1], [0, 0, 1, 1], [], []>} : vector<16x16xf32>, vector<16x8xf32>, vector<16x8xf32> -> vector<16x8xf32>
    %36 = vector.extract_strided_slice %4 {offsets = [0, 8], sizes = [16, 8], strides = [1, 1]} : vector<16x32xf32> to vector<16x8xf32>
    %37 = vector.extract_strided_slice %5 {offsets = [0, 5], sizes = [16, 1], strides = [1, 1]} : vector<16x8xf32> to vector<16x1xf32>
    %38 = vector.shape_cast %37 : vector<16x1xf32> to vector<16xf32>
    %39 = vector.shape_cast %38 : vector<16xf32> to vector<16x1xf32>
    %40 = vector.extract_strided_slice %5 {offsets = [0, 1], sizes = [16, 1], strides = [1, 1]} : vector<16x8xf32> to vector<16x1xf32>
    %41 = vector.shape_cast %40 : vector<16x1xf32> to vector<16xf32>
    %42 = vector.shape_cast %41 : vector<16xf32> to vector<1x16xf32>
    %43 = vector.broadcast %39 : vector<16x1xf32> to vector<16x16xf32>
    %44 = vector.broadcast %42 : vector<1x16xf32> to vector<16x16xf32>
    %45 = arith.addf %43, %44 : vector<16x16xf32>
    %cst_15 = arith.constant 0.000000e+00 : f32
    %46 = vector.broadcast %cst_15 : f32 to vector<16x16xf32>
    %47 = arith.cmpf ogt, %45, %46 : vector<16x16xf32>
    %cst_16 = arith.constant 2.000000e-01 : f32
    %48 = vector.broadcast %cst_16 : f32 to vector<16x16xf32>
    %49 = arith.mulf %48, %45 : vector<16x16xf32>
    %50 = arith.select %47, %45, %49 : vector<16x16xi1>, vector<16x16xf32>
    %cst_17 = arith.constant 0.000000e+00 : f32
    %51 = vector.broadcast %cst_17 : f32 to vector<16x16xf32>
    %52 = arith.cmpf ogt, %0, %51 : vector<16x16xf32>
    %cst_18 = arith.constant -1.000000e+30 : f32
    %53 = vector.broadcast %cst_18 : f32 to vector<16x16xf32>
    %54 = arith.select %52, %50, %53 : vector<16x16xi1>, vector<16x16xf32>
    %cst_19 = arith.constant dense<0xFF800000> : vector<16xf32>
    %55 = vector.multi_reduction <maximumf>, %54, %cst_19 [1] : vector<16x16xf32> to vector<16xf32>
    %56 = vector.shape_cast %55 : vector<16xf32> to vector<16x1xf32>
    %57 = vector.broadcast %56 : vector<16x1xf32> to vector<16x16xf32>
    %58 = arith.subf %54, %57 : vector<16x16xf32>
    %59 = math.exp %58 : vector<16x16xf32>
    %cst_20 = arith.constant dense<0.000000e+00> : vector<16xf32>
    %60 = vector.multi_reduction <add>, %59, %cst_20 [1] : vector<16x16xf32> to vector<16xf32>
    %61 = vector.shape_cast %60 : vector<16xf32> to vector<16x1xf32>
    %62 = tpu.reciprocal %61 {approx = true} : vector<16x1xf32> -> vector<16x1xf32>
    %63 = vector.broadcast %62 : vector<16x1xf32> to vector<16x16xf32>
    %64 = arith.mulf %59, %63 : vector<16x16xf32>
    %cst_21 = arith.constant dense<0.000000e+00> : vector<16x8xf32>
    %65 = tpu.matmul %64, %36, %cst_21 {dimension_numbers = #tpu.dot_dimension_numbers<[1], [0], [0], [1], [0, 0, 1, 1], [], []>} : vector<16x16xf32>, vector<16x8xf32>, vector<16x8xf32> -> vector<16x8xf32>
    %66 = vector.extract_strided_slice %4 {offsets = [0, 16], sizes = [16, 8], strides = [1, 1]} : vector<16x32xf32> to vector<16x8xf32>
    %67 = vector.extract_strided_slice %5 {offsets = [0, 6], sizes = [16, 1], strides = [1, 1]} : vector<16x8xf32> to vector<16x1xf32>
    %68 = vector.shape_cast %67 : vector<16x1xf32> to vector<16xf32>
    %69 = vector.shape_cast %68 : vector<16xf32> to vector<16x1xf32>
    %70 = vector.extract_strided_slice %5 {offsets = [0, 2], sizes = [16, 1], strides = [1, 1]} : vector<16x8xf32> to vector<16x1xf32>
    %71 = vector.shape_cast %70 : vector<16x1xf32> to vector<16xf32>
    %72 = vector.shape_cast %71 : vector<16xf32> to vector<1x16xf32>
    %73 = vector.broadcast %69 : vector<16x1xf32> to vector<16x16xf32>
    %74 = vector.broadcast %72 : vector<1x16xf32> to vector<16x16xf32>
    %75 = arith.addf %73, %74 : vector<16x16xf32>
    %cst_22 = arith.constant 0.000000e+00 : f32
    %76 = vector.broadcast %cst_22 : f32 to vector<16x16xf32>
    %77 = arith.cmpf ogt, %75, %76 : vector<16x16xf32>
    %cst_23 = arith.constant 2.000000e-01 : f32
    %78 = vector.broadcast %cst_23 : f32 to vector<16x16xf32>
    %79 = arith.mulf %78, %75 : vector<16x16xf32>
    %80 = arith.select %77, %75, %79 : vector<16x16xi1>, vector<16x16xf32>
    %cst_24 = arith.constant 0.000000e+00 : f32
    %81 = vector.broadcast %cst_24 : f32 to vector<16x16xf32>
    %82 = arith.cmpf ogt, %0, %81 : vector<16x16xf32>
    %cst_25 = arith.constant -1.000000e+30 : f32
    %83 = vector.broadcast %cst_25 : f32 to vector<16x16xf32>
    %84 = arith.select %82, %80, %83 : vector<16x16xi1>, vector<16x16xf32>
    %cst_26 = arith.constant dense<0xFF800000> : vector<16xf32>
    %85 = vector.multi_reduction <maximumf>, %84, %cst_26 [1] : vector<16x16xf32> to vector<16xf32>
    %86 = vector.shape_cast %85 : vector<16xf32> to vector<16x1xf32>
    %87 = vector.broadcast %86 : vector<16x1xf32> to vector<16x16xf32>
    %88 = arith.subf %84, %87 : vector<16x16xf32>
    %89 = math.exp %88 : vector<16x16xf32>
    %cst_27 = arith.constant dense<0.000000e+00> : vector<16xf32>
    %90 = vector.multi_reduction <add>, %89, %cst_27 [1] : vector<16x16xf32> to vector<16xf32>
    %91 = vector.shape_cast %90 : vector<16xf32> to vector<16x1xf32>
    %92 = tpu.reciprocal %91 {approx = true} : vector<16x1xf32> -> vector<16x1xf32>
    %93 = vector.broadcast %92 : vector<16x1xf32> to vector<16x16xf32>
    %94 = arith.mulf %89, %93 : vector<16x16xf32>
    %cst_28 = arith.constant dense<0.000000e+00> : vector<16x8xf32>
    %95 = tpu.matmul %94, %66, %cst_28 {dimension_numbers = #tpu.dot_dimension_numbers<[1], [0], [0], [1], [0, 0, 1, 1], [], []>} : vector<16x16xf32>, vector<16x8xf32>, vector<16x8xf32> -> vector<16x8xf32>
    %96 = vector.extract_strided_slice %4 {offsets = [0, 24], sizes = [16, 8], strides = [1, 1]} : vector<16x32xf32> to vector<16x8xf32>
    %97 = vector.extract_strided_slice %5 {offsets = [0, 7], sizes = [16, 1], strides = [1, 1]} : vector<16x8xf32> to vector<16x1xf32>
    %98 = vector.shape_cast %97 : vector<16x1xf32> to vector<16xf32>
    %99 = vector.shape_cast %98 : vector<16xf32> to vector<16x1xf32>
    %100 = vector.extract_strided_slice %5 {offsets = [0, 3], sizes = [16, 1], strides = [1, 1]} : vector<16x8xf32> to vector<16x1xf32>
    %101 = vector.shape_cast %100 : vector<16x1xf32> to vector<16xf32>
    %102 = vector.shape_cast %101 : vector<16xf32> to vector<1x16xf32>
    %103 = vector.broadcast %99 : vector<16x1xf32> to vector<16x16xf32>
    %104 = vector.broadcast %102 : vector<1x16xf32> to vector<16x16xf32>
    %105 = arith.addf %103, %104 : vector<16x16xf32>
    %cst_29 = arith.constant 0.000000e+00 : f32
    %106 = vector.broadcast %cst_29 : f32 to vector<16x16xf32>
    %107 = arith.cmpf ogt, %105, %106 : vector<16x16xf32>
    %cst_30 = arith.constant 2.000000e-01 : f32
    %108 = vector.broadcast %cst_30 : f32 to vector<16x16xf32>
    %109 = arith.mulf %108, %105 : vector<16x16xf32>
    %110 = arith.select %107, %105, %109 : vector<16x16xi1>, vector<16x16xf32>
    %cst_31 = arith.constant 0.000000e+00 : f32
    %111 = vector.broadcast %cst_31 : f32 to vector<16x16xf32>
    %112 = arith.cmpf ogt, %0, %111 : vector<16x16xf32>
    %cst_32 = arith.constant -1.000000e+30 : f32
    %113 = vector.broadcast %cst_32 : f32 to vector<16x16xf32>
    %114 = arith.select %112, %110, %113 : vector<16x16xi1>, vector<16x16xf32>
    %cst_33 = arith.constant dense<0xFF800000> : vector<16xf32>
    %115 = vector.multi_reduction <maximumf>, %114, %cst_33 [1] : vector<16x16xf32> to vector<16xf32>
    %116 = vector.shape_cast %115 : vector<16xf32> to vector<16x1xf32>
    %117 = vector.broadcast %116 : vector<16x1xf32> to vector<16x16xf32>
    %118 = arith.subf %114, %117 : vector<16x16xf32>
    %119 = math.exp %118 : vector<16x16xf32>
    %cst_34 = arith.constant dense<0.000000e+00> : vector<16xf32>
    %120 = vector.multi_reduction <add>, %119, %cst_34 [1] : vector<16x16xf32> to vector<16xf32>
    %121 = vector.shape_cast %120 : vector<16xf32> to vector<16x1xf32>
    %122 = tpu.reciprocal %121 {approx = true} : vector<16x1xf32> -> vector<16x1xf32>
    %123 = vector.broadcast %122 : vector<16x1xf32> to vector<16x16xf32>
    %124 = arith.mulf %119, %123 : vector<16x16xf32>
    %cst_35 = arith.constant dense<0.000000e+00> : vector<16x8xf32>
    %125 = tpu.matmul %124, %96, %cst_35 {dimension_numbers = #tpu.dot_dimension_numbers<[1], [0], [0], [1], [0, 0, 1, 1], [], []>} : vector<16x16xf32>, vector<16x8xf32>, vector<16x8xf32> -> vector<16x8xf32>
    %126 = tpu.concatenate %35, %65, %95, %125 in 1 : vector<16x8xf32>, vector<16x8xf32>, vector<16x8xf32>, vector<16x8xf32> -> vector<16x32xf32>
    %c0_36 = arith.constant 0 : index
    %c0_37 = arith.constant 0 : index
    %127 = vector.load %arg4[%c0_36, %c0_37] : memref<1x32xf32, #tpu.memory_space<vmem>>, vector<1x32xf32>
    %128 = vector.broadcast %127 : vector<1x32xf32> to vector<16x32xf32>
    %129 = arith.addf %126, %128 : vector<16x32xf32>
    %c0_38 = arith.constant 0 : index
    %c0_39 = arith.constant 0 : index
    %130 = vector.load %arg5[%c0_38, %c0_39] : memref<1x32xf32, #tpu.memory_space<vmem>>, vector<1x32xf32>
    %c0_40 = arith.constant 0 : index
    %c0_41 = arith.constant 0 : index
    %131 = vector.load %arg6[%c0_40, %c0_41] : memref<1x32xf32, #tpu.memory_space<vmem>>, vector<1x32xf32>
    %cst_42 = arith.constant dense<0.000000e+00> : vector<16xf32>
    %132 = vector.multi_reduction <add>, %129, %cst_42 [1] : vector<16x32xf32> to vector<16xf32>
    %133 = vector.shape_cast %132 : vector<16xf32> to vector<16x1xf32>
    %cst_43 = arith.constant 3.200000e+01 : f32
    %134 = vector.broadcast %cst_43 : f32 to vector<16x1xf32>
    %135 = arith.divf %133, %134 : vector<16x1xf32>
    %136 = vector.broadcast %135 : vector<16x1xf32> to vector<16x32xf32>
    %137 = arith.subf %129, %136 : vector<16x32xf32>
    %138 = arith.mulf %137, %137 : vector<16x32xf32>
    %cst_44 = arith.constant dense<0.000000e+00> : vector<16xf32>
    %139 = vector.multi_reduction <add>, %138, %cst_44 [1] : vector<16x32xf32> to vector<16xf32>
    %140 = vector.shape_cast %139 : vector<16xf32> to vector<16x1xf32>
    %cst_45 = arith.constant 3.200000e+01 : f32
    %141 = vector.broadcast %cst_45 : f32 to vector<16x1xf32>
    %142 = arith.divf %140, %141 : vector<16x1xf32>
    %cst_46 = arith.constant 9.99999974E-6 : f32
    %143 = vector.broadcast %cst_46 : f32 to vector<16x1xf32>
    %144 = arith.addf %142, %143 : vector<16x1xf32>
    %145 = math.rsqrt %144 : vector<16x1xf32>
    %146 = vector.broadcast %145 : vector<16x1xf32> to vector<16x32xf32>
    %147 = arith.mulf %137, %146 : vector<16x32xf32>
    %148 = vector.broadcast %130 : vector<1x32xf32> to vector<16x32xf32>
    %149 = arith.mulf %147, %148 : vector<16x32xf32>
    %150 = vector.broadcast %131 : vector<1x32xf32> to vector<16x32xf32>
    %151 = arith.addf %149, %150 : vector<16x32xf32>
    %cst_47 = arith.constant 0.000000e+00 : f32
    %152 = vector.broadcast %cst_47 : f32 to vector<16x32xf32>
    %153 = arith.cmpf ogt, %151, %152 : vector<16x32xf32>
    %cst_48 = arith.constant 0.000000e+00 : f32
    %154 = vector.broadcast %cst_48 : f32 to vector<16x32xf32>
    %155 = arith.minimumf %151, %154 : vector<16x32xf32>
    %156 = math.exp %155 : vector<16x32xf32>
    %cst_49 = arith.constant 1.000000e+00 : f32
    %157 = vector.broadcast %cst_49 : f32 to vector<16x32xf32>
    %158 = arith.subf %156, %157 : vector<16x32xf32>
    %159 = arith.select %153, %151, %158 : vector<16x32xi1>, vector<16x32xf32>
    %c0_50 = arith.constant 0 : index
    %c0_51 = arith.constant 0 : index
    %160 = vector.load %arg7[%c0_50, %c0_51] : memref<32x8xf32, #tpu.memory_space<vmem>>, vector<32x8xf32>
    %c0_52 = arith.constant 0 : index
    %c0_53 = arith.constant 0 : index
    %161 = vector.load %arg8[%c0_52, %c0_53] : memref<8x4xf32, #tpu.memory_space<vmem>>, vector<8x4xf32>
    %cst_54 = arith.constant dense<0.000000e+00> : vector<16x8xf32>
    %162 = tpu.matmul %159, %160, %cst_54 {dimension_numbers = #tpu.dot_dimension_numbers<[1], [0], [0], [1], [0, 0, 1, 1], [], []>} : vector<16x32xf32>, vector<32x8xf32>, vector<16x8xf32> -> vector<16x8xf32>
    %cst_55 = arith.constant dense<0.000000e+00> : vector<16x4xf32>
    %163 = tpu.matmul %162, %161, %cst_55 {dimension_numbers = #tpu.dot_dimension_numbers<[1], [0], [0], [1], [0, 0, 1, 1], [], []>} : vector<16x8xf32>, vector<8x4xf32>, vector<16x4xf32> -> vector<16x4xf32>
    %164 = vector.extract_strided_slice %162 {offsets = [0, 0], sizes = [16, 4], strides = [1, 1]} : vector<16x8xf32> to vector<16x4xf32>
    %165 = vector.extract_strided_slice %163 {offsets = [0, 2], sizes = [16, 1], strides = [1, 1]} : vector<16x4xf32> to vector<16x1xf32>
    %166 = vector.shape_cast %165 : vector<16x1xf32> to vector<16xf32>
    %167 = vector.shape_cast %166 : vector<16xf32> to vector<16x1xf32>
    %168 = vector.extract_strided_slice %163 {offsets = [0, 0], sizes = [16, 1], strides = [1, 1]} : vector<16x4xf32> to vector<16x1xf32>
    %169 = vector.shape_cast %168 : vector<16x1xf32> to vector<16xf32>
    %170 = vector.shape_cast %169 : vector<16xf32> to vector<1x16xf32>
    %171 = vector.broadcast %167 : vector<16x1xf32> to vector<16x16xf32>
    %172 = vector.broadcast %170 : vector<1x16xf32> to vector<16x16xf32>
    %173 = arith.addf %171, %172 : vector<16x16xf32>
    %cst_56 = arith.constant 0.000000e+00 : f32
    %174 = vector.broadcast %cst_56 : f32 to vector<16x16xf32>
    %175 = arith.cmpf ogt, %173, %174 : vector<16x16xf32>
    %cst_57 = arith.constant 2.000000e-01 : f32
    %176 = vector.broadcast %cst_57 : f32 to vector<16x16xf32>
    %177 = arith.mulf %176, %173 : vector<16x16xf32>
    %178 = arith.select %175, %173, %177 : vector<16x16xi1>, vector<16x16xf32>
    %cst_58 = arith.constant 0.000000e+00 : f32
    %179 = vector.broadcast %cst_58 : f32 to vector<16x16xf32>
    %180 = arith.cmpf ogt, %0, %179 : vector<16x16xf32>
    %cst_59 = arith.constant -1.000000e+30 : f32
    %181 = vector.broadcast %cst_59 : f32 to vector<16x16xf32>
    %182 = arith.select %180, %178, %181 : vector<16x16xi1>, vector<16x16xf32>
    %cst_60 = arith.constant dense<0xFF800000> : vector<16xf32>
    %183 = vector.multi_reduction <maximumf>, %182, %cst_60 [1] : vector<16x16xf32> to vector<16xf32>
    %184 = vector.shape_cast %183 : vector<16xf32> to vector<16x1xf32>
    %185 = vector.broadcast %184 : vector<16x1xf32> to vector<16x16xf32>
    %186 = arith.subf %182, %185 : vector<16x16xf32>
    %187 = math.exp %186 : vector<16x16xf32>
    %cst_61 = arith.constant dense<0.000000e+00> : vector<16xf32>
    %188 = vector.multi_reduction <add>, %187, %cst_61 [1] : vector<16x16xf32> to vector<16xf32>
    %189 = vector.shape_cast %188 : vector<16xf32> to vector<16x1xf32>
    %190 = tpu.reciprocal %189 {approx = true} : vector<16x1xf32> -> vector<16x1xf32>
    %191 = vector.broadcast %190 : vector<16x1xf32> to vector<16x16xf32>
    %192 = arith.mulf %187, %191 : vector<16x16xf32>
    %cst_62 = arith.constant dense<0.000000e+00> : vector<16x4xf32>
    %193 = tpu.matmul %192, %164, %cst_62 {dimension_numbers = #tpu.dot_dimension_numbers<[1], [0], [0], [1], [0, 0, 1, 1], [], []>} : vector<16x16xf32>, vector<16x4xf32>, vector<16x4xf32> -> vector<16x4xf32>
    %194 = vector.extract_strided_slice %162 {offsets = [0, 4], sizes = [16, 4], strides = [1, 1]} : vector<16x8xf32> to vector<16x4xf32>
    %195 = vector.extract_strided_slice %163 {offsets = [0, 3], sizes = [16, 1], strides = [1, 1]} : vector<16x4xf32> to vector<16x1xf32>
    %196 = vector.shape_cast %195 : vector<16x1xf32> to vector<16xf32>
    %197 = vector.shape_cast %196 : vector<16xf32> to vector<16x1xf32>
    %198 = vector.extract_strided_slice %163 {offsets = [0, 1], sizes = [16, 1], strides = [1, 1]} : vector<16x4xf32> to vector<16x1xf32>
    %199 = vector.shape_cast %198 : vector<16x1xf32> to vector<16xf32>
    %200 = vector.shape_cast %199 : vector<16xf32> to vector<1x16xf32>
    %201 = vector.broadcast %197 : vector<16x1xf32> to vector<16x16xf32>
    %202 = vector.broadcast %200 : vector<1x16xf32> to vector<16x16xf32>
    %203 = arith.addf %201, %202 : vector<16x16xf32>
    %cst_63 = arith.constant 0.000000e+00 : f32
    %204 = vector.broadcast %cst_63 : f32 to vector<16x16xf32>
    %205 = arith.cmpf ogt, %203, %204 : vector<16x16xf32>
    %cst_64 = arith.constant 2.000000e-01 : f32
    %206 = vector.broadcast %cst_64 : f32 to vector<16x16xf32>
    %207 = arith.mulf %206, %203 : vector<16x16xf32>
    %208 = arith.select %205, %203, %207 : vector<16x16xi1>, vector<16x16xf32>
    %cst_65 = arith.constant 0.000000e+00 : f32
    %209 = vector.broadcast %cst_65 : f32 to vector<16x16xf32>
    %210 = arith.cmpf ogt, %0, %209 : vector<16x16xf32>
    %cst_66 = arith.constant -1.000000e+30 : f32
    %211 = vector.broadcast %cst_66 : f32 to vector<16x16xf32>
    %212 = arith.select %210, %208, %211 : vector<16x16xi1>, vector<16x16xf32>
    %cst_67 = arith.constant dense<0xFF800000> : vector<16xf32>
    %213 = vector.multi_reduction <maximumf>, %212, %cst_67 [1] : vector<16x16xf32> to vector<16xf32>
    %214 = vector.shape_cast %213 : vector<16xf32> to vector<16x1xf32>
    %215 = vector.broadcast %214 : vector<16x1xf32> to vector<16x16xf32>
    %216 = arith.subf %212, %215 : vector<16x16xf32>
    %217 = math.exp %216 : vector<16x16xf32>
    %cst_68 = arith.constant dense<0.000000e+00> : vector<16xf32>
    %218 = vector.multi_reduction <add>, %217, %cst_68 [1] : vector<16x16xf32> to vector<16xf32>
    %219 = vector.shape_cast %218 : vector<16xf32> to vector<16x1xf32>
    %220 = tpu.reciprocal %219 {approx = true} : vector<16x1xf32> -> vector<16x1xf32>
    %221 = vector.broadcast %220 : vector<16x1xf32> to vector<16x16xf32>
    %222 = arith.mulf %217, %221 : vector<16x16xf32>
    %cst_69 = arith.constant dense<0.000000e+00> : vector<16x4xf32>
    %223 = tpu.matmul %222, %194, %cst_69 {dimension_numbers = #tpu.dot_dimension_numbers<[1], [0], [0], [1], [0, 0, 1, 1], [], []>} : vector<16x16xf32>, vector<16x4xf32>, vector<16x4xf32> -> vector<16x4xf32>
    %224 = arith.addf %193, %223 : vector<16x4xf32>
    %cst_70 = arith.constant 5.000000e-01 : f32
    %225 = vector.broadcast %cst_70 : f32 to vector<16x4xf32>
    %226 = arith.mulf %224, %225 : vector<16x4xf32>
    %c0_71 = arith.constant 0 : index
    %c0_72 = arith.constant 0 : index
    %227 = vector.load %arg9[%c0_71, %c0_72] : memref<1x4xf32, #tpu.memory_space<vmem>>, vector<1x4xf32>
    %228 = vector.broadcast %227 : vector<1x4xf32> to vector<16x4xf32>
    %229 = arith.addf %226, %228 : vector<16x4xf32>
    %c0_73 = arith.constant 0 : index
    %c0_74 = arith.constant 0 : index
    %230 = vector.load %arg10[%c0_73, %c0_74] : memref<1x4xf32, #tpu.memory_space<vmem>>, vector<1x4xf32>
    %c0_75 = arith.constant 0 : index
    %c0_76 = arith.constant 0 : index
    %231 = vector.load %arg11[%c0_75, %c0_76] : memref<1x4xf32, #tpu.memory_space<vmem>>, vector<1x4xf32>
    %cst_77 = arith.constant dense<0.000000e+00> : vector<16xf32>
    %232 = vector.multi_reduction <add>, %229, %cst_77 [1] : vector<16x4xf32> to vector<16xf32>
    %233 = vector.shape_cast %232 : vector<16xf32> to vector<16x1xf32>
    %cst_78 = arith.constant 4.000000e+00 : f32
    %234 = vector.broadcast %cst_78 : f32 to vector<16x1xf32>
    %235 = arith.divf %233, %234 : vector<16x1xf32>
    %236 = vector.broadcast %235 : vector<16x1xf32> to vector<16x4xf32>
    %237 = arith.subf %229, %236 : vector<16x4xf32>
    %238 = arith.mulf %237, %237 : vector<16x4xf32>
    %cst_79 = arith.constant dense<0.000000e+00> : vector<16xf32>
    %239 = vector.multi_reduction <add>, %238, %cst_79 [1] : vector<16x4xf32> to vector<16xf32>
    %240 = vector.shape_cast %239 : vector<16xf32> to vector<16x1xf32>
    %cst_80 = arith.constant 4.000000e+00 : f32
    %241 = vector.broadcast %cst_80 : f32 to vector<16x1xf32>
    %242 = arith.divf %240, %241 : vector<16x1xf32>
    %cst_81 = arith.constant 9.99999974E-6 : f32
    %243 = vector.broadcast %cst_81 : f32 to vector<16x1xf32>
    %244 = arith.addf %242, %243 : vector<16x1xf32>
    %245 = math.rsqrt %244 : vector<16x1xf32>
    %246 = vector.broadcast %245 : vector<16x1xf32> to vector<16x4xf32>
    %247 = arith.mulf %237, %246 : vector<16x4xf32>
    %248 = vector.broadcast %230 : vector<1x4xf32> to vector<16x4xf32>
    %249 = arith.mulf %247, %248 : vector<16x4xf32>
    %250 = vector.broadcast %231 : vector<1x4xf32> to vector<16x4xf32>
    %251 = arith.addf %249, %250 : vector<16x4xf32>
    %c0_82 = arith.constant 0 : index
    %c0_83 = arith.constant 0 : index
    %252 = vector.load %arg12[%c0_82, %c0_83] : memref<16x4xf32, #tpu.memory_space<vmem>>, vector<16x4xf32>
    tpu.vector_store %arg12[%c0_82, %c0_83], %251 {strides = array<i32>} : memref<16x4xf32, #tpu.memory_space<vmem>>, vector<16x4xf32>,
    %c0_84 = arith.constant 0 : index
    %c0_85 = arith.constant 0 : index
    %c0_86 = arith.constant 0 : index
    %253 = vector.load %arg13[%c0_84, %c0_85, %c0_86] : memref<2x16x16xf32, #tpu.memory_space<vmem>>, vector<1x16x16xf32>
    %254 = vector.shape_cast %253 : vector<1x16x16xf32> to vector<16x16xf32>
    %255 = vector.shape_cast %192 : vector<16x16xf32> to vector<1x16x16xf32>
    tpu.vector_store %arg13[%c0_84, %c0_85, %c0_86], %255 {strides = array<i32>} : memref<2x16x16xf32, #tpu.memory_space<vmem>>, vector<1x16x16xf32>,
    %c1 = arith.constant 1 : index
    %c0_87 = arith.constant 0 : index
    %c0_88 = arith.constant 0 : index
    %256 = vector.load %arg13[%c1, %c0_87, %c0_88] : memref<2x16x16xf32, #tpu.memory_space<vmem>>, vector<1x16x16xf32>
    %257 = vector.shape_cast %256 : vector<1x16x16xf32> to vector<16x16xf32>
    %258 = vector.shape_cast %222 : vector<16x16xf32> to vector<1x16x16xf32>
    tpu.vector_store %arg13[%c1, %c0_87, %c0_88], %258 {strides = array<i32>} : memref<2x16x16xf32, #tpu.memory_space<vmem>>, vector<1x16x16xf32>,
    return
  }
}

</mosaic_0001>

<llo_original>
// kernel: gat_forward.1
$region0: #{gat_forward.1}
  #allocation0 [shape = 'u32[]', space=smem, size = 0x4, offset = 0x4, fixed_abs, tag = 'smem constant byte address 0x4 - core index']
  #allocation1 [shape = 'u32[144,128]{1,0:T(1,128)}', space=vmem, size = 0x12000, scoped, tag = 'internal scratch']
  %s0 = inlined_call_operand.vmem [shape: f32[16,16], index: 0, kind: input, shape index: {}]
  %s1 = inlined_call_operand.vmem [shape: f32[16,16], index: 1, kind: input, shape index: {}]
  %s2 = inlined_call_operand.vmem [shape: f32[16,32], index: 2, kind: input, shape index: {}]
  %s3 = inlined_call_operand.vmem [shape: f32[32,8], index: 3, kind: input, shape index: {}]
  %s4 = inlined_call_operand.vmem [shape: f32[1,32], index: 4, kind: input, shape index: {}]
  %s5 = inlined_call_operand.vmem [shape: f32[1,32], index: 5, kind: input, shape index: {}]
  %s6 = inlined_call_operand.vmem [shape: f32[1,32], index: 6, kind: input, shape index: {}]
  %s7 = inlined_call_operand.vmem [shape: f32[32,8], index: 7, kind: input, shape index: {}]
  %s8 = inlined_call_operand.vmem [shape: f32[8,4], index: 8, kind: input, shape index: {}]
  %s9 = inlined_call_operand.vmem [shape: f32[1,4], index: 9, kind: input, shape index: {}]
  %s10 = inlined_call_operand.vmem [shape: f32[1,4], index: 10, kind: input, shape index: {}]
  %s11 = inlined_call_operand.vmem [shape: f32[1,4], index: 11, kind: input, shape index: {}]
  %s12 = inlined_call_operand.vmem [shape: f32[16,4], index: 12, kind: output, shape index: {0}]
  %s13 = inlined_call_operand.hbm [shape: f32[2,16,16], index: 13, kind: output, shape index: {1}]
  %14 = xla_tuple %s12, %s13
  %s15 = sld [smem:[#allocation0]]
  $region66: #{gat_forward.1} parent=0
    _
  %s17 = ssub.s32 1, %s15
  %s18 = scalar_select 0, %s17, %s15
  $region1: #{gat_forward.1} parent=0
    #allocation2 [shape = 'u8[16384]{0}', space=vmem, size = 0x4000, scoped, tag = 'output window, operand 1, single buffered']
    #allocation3 [shape = 's32[1]{0}', space=sflag, size = 0x4, scoped, tag = 'scoped memory for gat_forward.1']
    %19 = vsyncpa [#allocation3], 0
    // Predicated region
    $region2: #{gat_forward.1} parent=1 // pred_check
      _
    $region3: #{gat_forward.1} parent=1 // pred_check_branch
      %21 = sbr.rel (0) target = $region5
    $region4: #{gat_forward.1} parent=1 // pred_region
      _
    $region5: #{gat_forward.1} parent=1 // pred_fallthru
      _
    // Predicated region
    $region6: #{gat_forward.1} parent=1 // pred_check
      _
    $region7: #{gat_forward.1} parent=1 // pred_check_branch
      %23 = sbr.rel (0) target = $region9
    $region8: #{gat_forward.1} parent=1 // pred_region
      _
    $region9: #{gat_forward.1} parent=1 // pred_fallthru
      _
    // Predicated region
    $region10: #{gat_forward.1} parent=1 // pred_check
      _
    $region11: #{gat_forward.1} parent=1 // pred_check_branch
      %25 = sbr.rel (0) target = $region13
    $region12: #{gat_forward.1} parent=1 // pred_region
      _
    $region13: #{gat_forward.1} parent=1 // pred_fallthru
      _
    // Predicated region
    $region14: #{gat_forward.1} parent=1 // pred_check
      _
    $region15: #{gat_forward.1} parent=1 // pred_check_branch
      %27 = sbr.rel (0) target = $region17
    $region16: #{gat_forward.1} parent=1 // pred_region
      _
    $region17: #{gat_forward.1} parent=1 // pred_fallthru
      _
    // Predicated region
    $region18: #{gat_forward.1} parent=1 // pred_check
      _
    $region19: #{gat_forward.1} parent=1 // pred_check_branch
      %29 = sbr.rel (0) target = $region21
    $region20: #{gat_forward.1} parent=1 // pred_region
      _
    $region21: #{gat_forward.1} parent=1 // pred_fallthru
      _
    // Predicated region
    $region22: #{gat_forward.1} parent=1 // pred_check
      _
    $region23: #{gat_forward.1} parent=1 // pred_check_branch
      %31 = sbr.rel (0) target = $region25
    $region24: #{gat_forward.1} parent=1 // pred_region
      _
    $region25: #{gat_forward.1} parent=1 // pred_fallthru
      _
    // Predicated region
    $region26: #{gat_forward.1} parent=1 // pred_check
      _
    $region27: #{gat_forward.1} parent=1 // pred_check_branch
      %33 = sbr.rel (0) target = $region29
    $region28: #{gat_forward.1} parent=1 // pred_region
      _
    $region29: #{gat_forward.1} parent=1 // pred_fallthru
      _
    // Predicated region
    $region30: #{gat_forward.1} parent=1 // pred_check
      _
    $region31: #{gat_forward.1} parent=1 // pred_check_branch
      %35 = sbr.rel (0) target = $region33
    $region32: #{gat_forward.1} parent=1 // pred_region
      _
    $region33: #{gat_forward.1} parent=1 // pred_fallthru
      _
    // Predicated region
    $region34: #{gat_forward.1} parent=1 // pred_check
      _
    $region35: #{gat_forward.1} parent=1 // pred_check_branch
      %37 = sbr.rel (0) target = $region37
    $region36: #{gat_forward.1} parent=1 // pred_region
      _
    $region37: #{gat_forward.1} parent=1 // pred_fallthru
      _
    // Predicated region
    $region38: #{gat_forward.1} parent=1 // pred_check
      _
    $region39: #{gat_forward.1} parent=1 // pred_check_branch
      %39 = sbr.rel (0) target = $region41
    $region40: #{gat_forward.1} parent=1 // pred_region
      _
    $region41: #{gat_forward.1} parent=1 // pred_fallthru
      _
    // Predicated region
    $region42: #{gat_forward.1} parent=1 // pred_check
      _
    $region43: #{gat_forward.1} parent=1 // pred_check_branch
      %41 = sbr.rel (0) target = $region45
    $region44: #{gat_forward.1} parent=1 // pred_region
      _
    $region45: #{gat_forward.1} parent=1 // pred_fallthru
      _
    // Predicated region
    $region46: #{gat_forward.1} parent=1 // pred_check
      _
    $region47: #{gat_forward.1} parent=1 // pred_check_branch
      %43 = sbr.rel (0) target = $region49
    $region48: #{gat_forward.1} parent=1 // pred_region
      _
    $region49: #{gat_forward.1} parent=1 // pred_fallthru
      _
    %v44 = vld [vmem:[%s1] sm:$0xff]
    %v45 = vld [vmem:[%s1 + $0x8] sm:$0xff]
    %v46 = vld [vmem:[%s0] sm:$0xff]
    %v47 = vld [vmem:[%s0 + $0x8] sm:$0xff]
    %v48 = vld [vmem:[%s2] sm:$0xff]
    %v49 = vld [vmem:[%s2 + $0x8] sm:$0xff]
    %v50 = vld [vmem:[%s3] sm:$0xff]
    %v51 = vld [vmem:[%s3 + $0x8] sm:$0xff]
    %v52 = vld [vmem:[%s3 + $0x10] sm:$0xff]
    %v53 = vld [vmem:[%s3 + $0x18] sm:$0xff]
    %vm54 = vcmask 130048
    %v56 = vsel %vm54, %v46, 0
    %v59 = vsel %vm54, %v47, 0
    %61 = vmatprep.subr.mxu0 0.0
    %62 = vmatpush1.msra.mxu0 %v48
    %63 = vmatprep.subr.mxu0 0.0
    %64 = vmatpush1.msra.mxu0 %v49
    %65 = vmatprep.subr.mxu0 0.0
    %66 = vmatpush1.msra.mxu0 0.0
    %67 = vmatprep.subr.mxu0 0.0
    %68 = vmatpush1.msra.mxu0 0.0
    %69 = vmatprep.subr.mxu0 0.0
    %70 = vmatpush1.msra.mxu0 0.0
    %71 = vmatprep.subr.mxu0 0.0
    %72 = vmatpush1.msra.mxu0 0.0
    %73 = vmatprep.subr.mxu0 0.0
    %74 = vmatpush1.msra.mxu0 0.0
    %75 = vmatprep.subr.mxu0 0.0
    %76 = vmatpush1.msra.mxu0 0.0
    %77 = vmatprep.subr.mxu0 0.0
    %78 = vmatpush1.msra.mxu0 0.0
    %79 = vmatprep.subr.mxu0 0.0
    %80 = vmatpush1.msra.mxu0 0.0
    %81 = vmatprep.subr.mxu0 0.0
    %82 = vmatpush1.msra.mxu0 0.0
    %83 = vmatprep.subr.mxu0 0.0
    %84 = vmatpush1.msra.mxu0 0.0
    %85 = vmatprep.subr.mxu0 0.0
    %86 = vmatpush1.msra.mxu0 0.0
    %87 = vmatprep.subr.mxu0 0.0
    %88 = vmatpush1.msra.mxu0 0.0
    %89 = vmatprep.subr.mxu0 0.0
    %90 = vmatpush1.msra.mxu0 0.0
    %91 = vmatprep.subr.mxu0 0.0
    %92 = vmatpush1.msra.mxu0 0.0
    %93 = vmatprep.subr.mxu0 0.0
    %94 = vmatpush1.msra.mxu0 0.0
    %95 = vmatprep.subr.mxu0 0.0
    %96 = vmatpush1.msra.mxu0 0.0
    %97 = vmatprep.subr.mxu0 0.0
    %98 = vmatpush1.msra.mxu0 0.0
    %99 = vmatprep.subr.mxu0 0.0
    %100 = vmatpush1.msra.mxu0 0.0
    %101 = vmatprep.subr.mxu0 0.0
    %102 = vmatpush1.msra.mxu0 0.0
    %103 = vmatprep.subr.mxu0 0.0
    %104 = vmatpush1.msra.mxu0 0.0
    %105 = vmatprep.subr.mxu0 0.0
    %106 = vmatpush1.msra.mxu0 0.0
    %107 = vmatprep.subr.mxu0 0.0
    %108 = vmatpush1.msra.mxu0 0.0
    %109 = vmatprep.subr.mxu0 0.0
    %110 = vmatpush1.msra.mxu0 0.0
    %111 = vmatprep.subr.mxu0 0.0
    %112 = vmatpush1.msra.mxu0 0.0
    %113 = vmatprep.subr.mxu0 0.0
    %114 = vmatpush1.msra.mxu0 0.0
    %115 = vmatprep.subr.mxu0 0.0
    %116 = vmatpush1.msra.mxu0 0.0
    %117 = vmatprep.subr.mxu0 0.0
    %118 = vmatpush1.msra.mxu0 0.0
    %119 = vmatprep.subr.mxu0 0.0
    %120 = vmatpush1.msra.mxu0 0.0
    %121 = vmatprep.subr.mxu0 0.0
    %122 = vmatpush1.msra.mxu0 0.0
    %123 = vmatprep.subr.mxu0 0.0
    %124 = vmatpush1.msra.mxu0 0.0
    %125 = vmatprep.mubr.f32.mxu0 0.0
    %126 = vmatmul.mubr.f32.gmra.mrb[0].mxu0 %v56
    %v127 = vpop.f32.mrb[0].mxu0
    %v128 = vadd.f32 0.0, %v127
    %v129 = vpop.f32.mrb[0].mxu0
    %130 = vmatprep.mubr.f32.mxu0 0.0
    %131 = vmatmul.mubr.f32.gmra.mrb[0].mxu0 %v59
    %v132 = vpop.f32.mrb[0].mxu0
    %v133 = vadd.f32 0.0, %v132
    %v134 = vpop.f32.mrb[0].mxu0
    %135 = vdwg.mxu0
    %vm136 = vcmask 261120
    %v138 = vsel %vm136, %v128, 0
    %v141 = vsel %vm136, %v133, 0
    %143 = vmatprep.subr.mxu0 0.0
    %144 = vmatpush1.msra.mxu0 %v50
    %145 = vmatprep.subr.mxu0 0.0
    %146 = vmatpush1.msra.mxu0 %v51
    %147 = vmatprep.subr.mxu0 0.0
    %148 = vmatpush1.msra.mxu0 %v52
    %149 = vmatprep.subr.mxu0 0.0
    %150 = vmatpush1.msra.mxu0 %v53
    %151 = vmatprep.subr.mxu0 0.0
    %152 = vmatpush1.msra.mxu0 0.0
    %153 = vmatprep.subr.mxu0 0.0
    %154 = vmatpush1.msra.mxu0 0.0
    %155 = vmatprep.subr.mxu0 0.0
    %156 = vmatpush1.msra.mxu0 0.0
    %157 = vmatprep.subr.mxu0 0.0
    %158 = vmatpush1.msra.mxu0 0.0
    %159 = vmatprep.subr.mxu0 0.0
    %160 = vmatpush1.msra.mxu0 0.0
    %161 = vmatprep.subr.mxu0 0.0
    %162 = vmatpush1.msra.mxu0 0.0
    %163 = vmatprep.subr.mxu0 0.0
    %164 = vmatpush1.msra.mxu0 0.0
    %165 = vmatprep.subr.mxu0 0.0
    %166 = vmatpush1.msra.mxu0 0.0
    %167 = vmatprep.subr.mxu0 0.0
    %168 = vmatpush1.msra.mxu0 0.0
    %169 = vmatprep.subr.mxu0 0.0
    %170 = vmatpush1.msra.mxu0 0.0
    %171 = vmatprep.subr.mxu0 0.0
    %172 = vmatpush1.msra.mxu0 0.0
    %173 = vmatprep.subr.mxu0 0.0
    %174 = vmatpush1.msra.mxu0 0.0
    %175 = vmatprep.subr.mxu0 0.0
    %176 = vmatpush1.msra.mxu0 0.0
    %177 = vmatprep.subr.mxu0 0.0
    %178 = vmatpush1.msra.mxu0 0.0
    %179 = vmatprep.subr.mxu0 0.0
    %180 = vmatpush1.msra.mxu0 0.0
    %181 = vmatprep.subr.mxu0 0.0
    %182 = vmatpush1.msra.mxu0 0.0
    %183 = vmatprep.subr.mxu0 0.0
    %184 = vmatpush1.msra.mxu0 0.0
    %185 = vmatprep.subr.mxu0 0.0
    %186 = vmatpush1.msra.mxu0 0.0
    %187 = vmatprep.subr.mxu0 0.0
    %188 = vmatpush1.msra.mxu0 0.0
    %189 = vmatprep.subr.mxu0 0.0
    %190 = vmatpush1.msra.mxu0 0.0
    %191 = vmatprep.subr.mxu0 0.0
    %192 = vmatpush1.msra.mxu0 0.0
    %193 = vmatprep.subr.mxu0 0.0
    %194 = vmatpush1.msra.mxu0 0.0
    %195 = vmatprep.subr.mxu0 0.0
    %196 = vmatpush1.msra.mxu0 0.0
    %197 = vmatprep.subr.mxu0 0.0
    %198 = vmatpush1.msra.mxu0 0.0
    %199 = vmatprep.subr.mxu0 0.0
    %200 = vmatpush1.msra.mxu0 0.0
    %201 = vmatprep.subr.mxu0 0.0
    %202 = vmatpush1.msra.mxu0 0.0
    %203 = vmatprep.subr.mxu0 0.0
    %204 = vmatpush1.msra.mxu0 0.0
    %205 = vmatprep.subr.mxu0 0.0
    %206 = vmatpush1.msra.mxu0 0.0
    %207 = vmatprep.mubr.f32.mxu0 0.0
    %208 = vmatmul.mubr.f32.gmra.mrb[0].mxu0 %v138
    %v209 = vpop.f32.mrb[0].mxu0
    %v210 = vadd.f32 0.0, %v209
    %v211 = vpop.f32.mrb[0].mxu0
    %212 = vmatprep.mubr.f32.mxu0 0.0
    %213 = vmatmul.mubr.f32.gmra.mrb[0].mxu0 %v141
    %v214 = vpop.f32.mrb[0].mxu0
    %v215 = vadd.f32 0.0, %v214
    %v216 = vpop.f32.mrb[0].mxu0
    %217 = vdwg.mxu0
    %219 = vset.pattern.permute.xlu0 4
    %220 = vperm.xlu0 %219, %v210
    %v221 = vpop.permute.xlu0 %220
    %224 = vset.pattern.permute.xlu0 4
    %225 = vperm.xlu0 %224, %v215
    %v226 = vpop.permute.xlu0 %225
    %228 = vset.pattern.permute.xlu0 0
    %229 = vperm.xlu0 %228, %v210
    %v230 = vpop.permute.xlu0 %229
    %231 = vset.pattern.permute.xlu0 0
    %232 = vperm.xlu0 %231, %v215
    %v233 = vpop.permute.xlu0 %232
    %v234 = vlaneseq
    %v235 = vand.u32 %v234, 127
    %v236 = vlaneseq
    %v237 = vshrl.u32 %v236, 7
    %v238 = vsub.s32 %v235, %v237
    %v239 = vrot.slane %v230, %v238
    %v240 = vadd.s32 %v235, 4294967288
    %v241 = vlaneseq
    %v242 = vshrl.u32 %v241, 7
    %v243 = vsub.s32 %v240, %v242
    %v244 = vrot.slane %v233, %v243
    %vm245 = vcmask 130112
    %v246 = vsel %vm245, %v244, %v239
    %vm247 = vcmask 1042434
    %v248 = vsel %vm247, %v246, %v246
    %vm249 = vcmask 1043459
    %v250 = vsel %vm249, %v246, %v248
    %vm251 = vcmask 1044484
    %v252 = vsel %vm251, %v246, %v250
    %vm253 = vcmask 1045509
    %v254 = vsel %vm253, %v246, %v252
    %vm255 = vcmask 1046534
    %v256 = vsel %vm255, %v246, %v254
    %vm257 = vcmask 1047559
    %v258 = vsel %vm257, %v246, %v256
    %v260 = vadd.f32 %v221, %v258
    %v261 = vadd.f32 %v226, %v258
    %vm262 = vcmp.gt.f32.partialorder %v260, 0.0
    %vm263 = vcmp.gt.f32.partialorder %v261, 0.0
    %v264 = vmul.f32 %v260, 0.2
    %v265 = vmul.f32 %v261, 0.2
    %v266 = vsel %vm262, %v260, %v264
    %v267 = vsel %vm263, %v261, %v265
    %vm268 = vcmp.gt.f32.partialorder %v44, 0.0
    %vm269 = vcmp.gt.f32.partialorder %v45, 0.0
    %v270 = vsel %vm268, %v266, -1e+30
    %v271 = vsel %vm269, %v267, -1e+30
    %v272 = vsel %vm54, %v270, -inf
    %273 = vmax.xlane.f32.xlu0 %v272
    %v274 = vpop.xlane.xlu0 %273
    %v275 = vsel %vm54, %v271, -inf
    %276 = vmax.xlane.f32.xlu0 %v275
    %v277 = vpop.xlane.xlu0 %276
    %v278 = vsub.f32 %v270, %v274
    %v279 = vsub.f32 %v271, %v277
    %v280 = vmul.f32 %v278, 1.442695
    %v281 = vpow.pop %v280
    %v282 = vmul.f32 %v279, 1.442695
    %v283 = vpow.pop %v282
    %v284 = vsel %vm54, %v281, 0.0
    %285 = vadd.xlane.f32.xlu0 %v284
    %v286 = vpop.xlane.xlu0 %285
    %v287 = vsel %vm54, %v283, 0.0
    %288 = vadd.xlane.f32.xlu0 %v287
    %v289 = vpop.xlane.xlu0 %288
    %v290 = vrcp.pop %v286
    %v291 = vrcp.pop %v289
    %v292 = vmul.f32 %v281, %v290
    %v293 = vmul.f32 %v283, %v291
    %v295 = vsel %vm54, %v292, 0
    %v298 = vsel %vm54, %v293, 0
    %300 = vmatprep.subr.mxu0 0.0
    %301 = vmatpush1.msra.mxu0 %v128
    %302 = vmatprep.subr.mxu0 0.0
    %303 = vmatpush1.msra.mxu0 %v133
    %304 = vmatprep.subr.mxu0 0.0
    %305 = vmatpush1.msra.mxu0 0.0
    %306 = vmatprep.subr.mxu0 0.0
    %307 = vmatpush1.msra.mxu0 0.0
    %308 = vmatprep.subr.mxu0 0.0
    %309 = vmatpush1.msra.mxu0 0.0
    %310 = vmatprep.subr.mxu0 0.0
    %311 = vmatpush1.msra.mxu0 0.0
    %312 = vmatprep.subr.mxu0 0.0
    %313 = vmatpush1.msra.mxu0 0.0
    %314 = vmatprep.subr.mxu0 0.0
    %315 = vmatpush1.msra.mxu0 0.0
    %316 = vmatprep.subr.mxu0 0.0
    %317 = vmatpush1.msra.mxu0 0.0
    %318 = vmatprep.subr.mxu0 0.0
    %319 = vmatpush1.msra.mxu0 0.0
    %320 = vmatprep.subr.mxu0 0.0
    %321 = vmatpush1.msra.mxu0 0.0
    %322 = vmatprep.subr.mxu0 0.0
    %323 = vmatpush1.msra.mxu0 0.0
    %324 = vmatprep.subr.mxu0 0.0
    %325 = vmatpush1.msra.mxu0 0.0
    %326 = vmatprep.subr.mxu0 0.0
    %327 = vmatpush1.msra.mxu0 0.0
    %328 = vmatprep.subr.mxu0 0.0
    %329 = vmatpush1.msra.mxu0 0.0
    %330 = vmatprep.subr.mxu0 0.0
    %331 = vmatpush1.msra.mxu0 0.0
    %332 = vmatprep.subr.mxu0 0.0
    %333 = vmatpush1.msra.mxu0 0.0
    %334 = vmatprep.subr.mxu0 0.0
    %335 = vmatpush1.msra.mxu0 0.0
    %336 = vmatprep.subr.mxu0 0.0
    %337 = vmatpush1.msra.mxu0 0.0
    %338 = vmatprep.subr.mxu0 0.0
    %339 = vmatpush1.msra.mxu0 0.0
    %340 = vmatprep.subr.mxu0 0.0
    %341 = vmatpush1.msra.mxu0 0.0
    %342 = vmatprep.subr.mxu0 0.0
    %343 = vmatpush1.msra.mxu0 0.0
    %344 = vmatprep.subr.mxu0 0.0
    %345 = vmatpush1.msra.mxu0 0.0
    %346 = vmatprep.subr.mxu0 0.0
    %347 = vmatpush1.msra.mxu0 0.0
    %348 = vmatprep.subr.mxu0 0.0
    %349 = vmatpush1.msra.mxu0 0.0
    %350 = vmatprep.subr.mxu0 0.0
    %351 = vmatpush1.msra.mxu0 0.0
    %352 = vmatprep.subr.mxu0 0.0
    %353 = vmatpush1.msra.mxu0 0.0
    %354 = vmatprep.subr.mxu0 0.0
    %355 = vmatpush1.msra.mxu0 0.0
    %356 = vmatprep.subr.mxu0 0.0
    %357 = vmatpush1.msra.mxu0 0.0
    %358 = vmatprep.subr.mxu0 0.0
    %359 = vmatpush1.msra.mxu0 0.0
    %360 = vmatprep.subr.mxu0 0.0
    %361 = vmatpush1.msra.mxu0 0.0
    %362 = vmatprep.subr.mxu0 0.0
    %363 = vmatpush1.msra.mxu0 0.0
    %364 = vmatprep.mubr.f32.mxu0 0.0
    %365 = vmatmul.mubr.f32.gmra.mrb[0].mxu0 %v295
    %v366 = vpop.f32.mrb[0].mxu0
    %v367 = vadd.f32 0.0, %v366
    %v368 = vpop.f32.mrb[0].mxu0
    %369 = vmatprep.mubr.f32.mxu0 0.0
    %370 = vmatmul.mubr.f32.gmra.mrb[0].mxu0 %v298
    %v371 = vpop.f32.mrb[0].mxu0
    %v372 = vadd.f32 0.0, %v371
    %v373 = vpop.f32.mrb[0].mxu0
    %374 = vdwg.mxu0
    %375 = vset.pattern.permute.xlu0 5
    %376 = vperm.xlu0 %375, %v210
    %v377 = vpop.permute.xlu0 %376
    %379 = vset.pattern.permute.xlu0 5
    %380 = vperm.xlu0 %379, %v215
    %v381 = vpop.permute.xlu0 %380
    %383 = vset.pattern.permute.xlu0 1
    %384 = vperm.xlu0 %383, %v210
    %v385 = vpop.permute.xlu0 %384
    %386 = vset.pattern.permute.xlu0 1
    %387 = vperm.xlu0 %386, %v215
    %v388 = vpop.permute.xlu0 %387
    %v389 = vlaneseq
    %v390 = vshrl.u32 %v389, 7
    %v391 = vsub.s32 %v235, %v390
    %v392 = vrot.slane %v385, %v391
    %v393 = vlaneseq
    %v394 = vshrl.u32 %v393, 7
    %v395 = vsub.s32 %v240, %v394
    %v396 = vrot.slane %v388, %v395
    %v397 = vsel %vm245, %v396, %v392
    %v398 = vsel %vm247, %v397, %v397
    %v399 = vsel %vm249, %v397, %v398
    %v400 = vsel %vm251, %v397, %v399
    %v401 = vsel %vm253, %v397, %v400
    %v402 = vsel %vm255, %v397, %v401
    %v403 = vsel %vm257, %v397, %v402
    %v405 = vadd.f32 %v377, %v403
    %v406 = vadd.f32 %v381, %v403
    %vm407 = vcmp.gt.f32.partialorder %v405, 0.0
    %vm408 = vcmp.gt.f32.partialorder %v406, 0.0
    %v409 = vmul.f32 %v405, 0.2
    %v410 = vmul.f32 %v406, 0.2
    %v411 = vsel %vm407, %v405, %v409
    %v412 = vsel %vm408, %v406, %v410
    %v413 = vsel %vm268, %v411, -1e+30
    %v414 = vsel %vm269, %v412, -1e+30
    %v415 = vsel %vm54, %v413, -inf
    %416 = vmax.xlane.f32.xlu0 %v415
    %v417 = vpop.xlane.xlu0 %416
    %v418 = vsel %vm54, %v414, -inf
    %419 = vmax.xlane.f32.xlu0 %v418
    %v420 = vpop.xlane.xlu0 %419
    %v421 = vsub.f32 %v413, %v417
    %v422 = vsub.f32 %v414, %v420
    %v423 = vmul.f32 %v421, 1.442695
    %v424 = vpow.pop %v423
    %v425 = vmul.f32 %v422, 1.442695
    %v426 = vpow.pop %v425
    %v427 = vsel %vm54, %v424, 0.0
    %428 = vadd.xlane.f32.xlu0 %v427
    %v429 = vpop.xlane.xlu0 %428
    %v430 = vsel %vm54, %v426, 0.0
    %431 = vadd.xlane.f32.xlu0 %v430
    %v432 = vpop.xlane.xlu0 %431
    %v433 = vrcp.pop %v429
    %v434 = vrcp.pop %v432
    %v435 = vmul.f32 %v424, %v433
    %v436 = vmul.f32 %v426, %v434
    %437 = vrot.lane.b32.xlu0 %v128, 120
    %v438 = vpop.permute.xlu0 %437
    %439 = vrot.lane.b32.xlu0 %v133, 120
    %v440 = vpop.permute.xlu0 %439
    %v444 = vsel %vm54, %v435, 0
    %v447 = vsel %vm54, %v436, 0
    %449 = vmatprep.subr.mxu0 0.0
    %450 = vmatpush1.msra.mxu0 %v438
    %451 = vmatprep.subr.mxu0 0.0
    %452 = vmatpush1.msra.mxu0 %v440
    %453 = vmatprep.subr.mxu0 0.0
    %454 = vmatpush1.msra.mxu0 0.0
    %455 = vmatprep.subr.mxu0 0.0
    %456 = vmatpush1.msra.mxu0 0.0
    %457 = vmatprep.subr.mxu0 0.0
    %458 = vmatpush1.msra.mxu0 0.0
    %459 = vmatprep.subr.mxu0 0.0
    %460 = vmatpush1.msra.mxu0 0.0
    %461 = vmatprep.subr.mxu0 0.0
    %462 = vmatpush1.msra.mxu0 0.0
    %463 = vmatprep.subr.mxu0 0.0
    %464 = vmatpush1.msra.mxu0 0.0
    %465 = vmatprep.subr.mxu0 0.0
    %466 = vmatpush1.msra.mxu0 0.0
    %467 = vmatprep.subr.mxu0 0.0
    %468 = vmatpush1.msra.mxu0 0.0
    %469 = vmatprep.subr.mxu0 0.0
    %470 = vmatpush1.msra.mxu0 0.0
    %471 = vmatprep.subr.mxu0 0.0
    %472 = vmatpush1.msra.mxu0 0.0
    %473 = vmatprep.subr.mxu0 0.0
    %474 = vmatpush1.msra.mxu0 0.0
    %475 = vmatprep.subr.mxu0 0.0
    %476 = vmatpush1.msra.mxu0 0.0
    %477 = vmatprep.subr.mxu0 0.0
    %478 = vmatpush1.msra.mxu0 0.0
    %479 = vmatprep.subr.mxu0 0.0
    %480 = vmatpush1.msra.mxu0 0.0
    %481 = vmatprep.subr.mxu0 0.0
    %482 = vmatpush1.msra.mxu0 0.0
    %483 = vmatprep.subr.mxu0 0.0
    %484 = vmatpush1.msra.mxu0 0.0
    %485 = vmatprep.subr.mxu0 0.0
    %486 = vmatpush1.msra.mxu0 0.0
    %487 = vmatprep.subr.mxu0 0.0
    %488 = vmatpush1.msra.mxu0 0.0
    %489 = vmatprep.subr.mxu0 0.0
    %490 = vmatpush1.msra.mxu0 0.0
    %491 = vmatprep.subr.mxu0 0.0
    %492 = vmatpush1.msra.mxu0 0.0
    %493 = vmatprep.subr.mxu0 0.0
    %494 = vmatpush1.msra.mxu0 0.0
    %495 = vmatprep.subr.mxu0 0.0
    %496 = vmatpush1.msra.mxu0 0.0
    %497 = vmatprep.subr.mxu0 0.0
    %498 = vmatpush1.msra.mxu0 0.0
    %499 = vmatprep.subr.mxu0 0.0
    %500 = vmatpush1.msra.mxu0 0.0
    %501 = vmatprep.subr.mxu0 0.0
    %502 = vmatpush1.msra.mxu0 0.0
    %503 = vmatprep.subr.mxu0 0.0
    %504 = vmatpush1.msra.mxu0 0.0
    %505 = vmatprep.subr.mxu0 0.0
    %506 = vmatpush1.msra.mxu0 0.0
    %507 = vmatprep.subr.mxu0 0.0
    %508 = vmatpush1.msra.mxu0 0.0
    %509 = vmatprep.subr.mxu0 0.0
    %510 = vmatpush1.msra.mxu0 0.0
    %511 = vmatprep.subr.mxu0 0.0
    %512 = vmatpush1.msra.mxu0 0.0
    %513 = vmatprep.mubr.f32.mxu0 0.0
    %514 = vmatmul.mubr.f32.gmra.mrb[0].mxu0 %v444
    %v515 = vpop.f32.mrb[0].mxu0
    %v516 = vadd.f32 0.0, %v515
    %v517 = vpop.f32.mrb[0].mxu0
    %518 = vmatprep.mubr.f32.mxu0 0.0
    %519 = vmatmul.mubr.f32.gmra.mrb[0].mxu0 %v447
    %v520 = vpop.f32.mrb[0].mxu0
    %v521 = vadd.f32 0.0, %v520
    %v522 = vpop.f32.mrb[0].mxu0
    %523 = vdwg.mxu0
    %524 = vset.pattern.permute.xlu0 6
    %525 = vperm.xlu0 %524, %v210
    %v526 = vpop.permute.xlu0 %525
    %528 = vset.pattern.permute.xlu0 6
    %529 = vperm.xlu0 %528, %v215
    %v530 = vpop.permute.xlu0 %529
    %532 = vset.pattern.permute.xlu0 2
    %533 = vperm.xlu0 %532, %v210
    %v534 = vpop.permute.xlu0 %533
    %535 = vset.pattern.permute.xlu0 2
    %536 = vperm.xlu0 %535, %v215
    %v537 = vpop.permute.xlu0 %536
    %v538 = vlaneseq
    %v539 = vshrl.u32 %v538, 7
    %v540 = vsub.s32 %v235, %v539
    %v541 = vrot.slane %v534, %v540
    %v542 = vlaneseq
    %v543 = vshrl.u32 %v542, 7
    %v544 = vsub.s32 %v240, %v543
    %v545 = vrot.slane %v537, %v544
    %v546 = vsel %vm245, %v545, %v541
    %v547 = vsel %vm247, %v546, %v546
    %v548 = vsel %vm249, %v546, %v547
    %v549 = vsel %vm251, %v546, %v548
    %v550 = vsel %vm253, %v546, %v549
    %v551 = vsel %vm255, %v546, %v550
    %v552 = vsel %vm257, %v546, %v551
    %v554 = vadd.f32 %v526, %v552
    %v555 = vadd.f32 %v530, %v552
    %vm556 = vcmp.gt.f32.partialorder %v554, 0.0
    %vm557 = vcmp.gt.f32.partialorder %v555, 0.0
    %v558 = vmul.f32 %v554, 0.2
    %v559 = vmul.f32 %v555, 0.2
    %v560 = vsel %vm556, %v554, %v558
    %v561 = vsel %vm557, %v555, %v559
    %v562 = vsel %vm268, %v560, -1e+30
    %v563 = vsel %vm269, %v561, -1e+30
    %v564 = vsel %vm54, %v562, -inf
    %565 = vmax.xlane.f32.xlu0 %v564
    %v566 = vpop.xlane.xlu0 %565
    %v567 = vsel %vm54, %v563, -inf
    %568 = vmax.xlane.f32.xlu0 %v567
    %v569 = vpop.xlane.xlu0 %568
    %v570 = vsub.f32 %v562, %v566
    %v571 = vsub.f32 %v563, %v569
    %v572 = vmul.f32 %v570, 1.442695
    %v573 = vpow.pop %v572
    %v574 = vmul.f32 %v571, 1.442695
    %v575 = vpow.pop %v574
    %v576 = vsel %vm54, %v573, 0.0
    %577 = vadd.xlane.f32.xlu0 %v576
    %v578 = vpop.xlane.xlu0 %577
    %v579 = vsel %vm54, %v575, 0.0
    %580 = vadd.xlane.f32.xlu0 %v579
    %v581 = vpop.xlane.xlu0 %580
    %v582 = vrcp.pop %v578
    %v583 = vrcp.pop %v581
    %v584 = vmul.f32 %v573, %v582
    %v585 = vmul.f32 %v575, %v583
    %586 = vrot.lane.b32.xlu0 %v128, 112
    %v587 = vpop.permute.xlu0 %586
    %588 = vrot.lane.b32.xlu0 %v133, 112
    %v589 = vpop.permute.xlu0 %588
    %v593 = vsel %vm54, %v584, 0
    %v596 = vsel %vm54, %v585, 0
    %598 = vmatprep.subr.mxu0 0.0
    %599 = vmatpush1.msra.mxu0 %v587
    %600 = vmatprep.subr.mxu0 0.0
    %601 = vmatpush1.msra.mxu0 %v589
    %602 = vmatprep.subr.mxu0 0.0
    %603 = vmatpush1.msra.mxu0 0.0
    %604 = vmatprep.subr.mxu0 0.0
    %605 = vmatpush1.msra.mxu0 0.0
    %606 = vmatprep.subr.mxu0 0.0
    %607 = vmatpush1.msra.mxu0 0.0
    %608 = vmatprep.subr.mxu0 0.0
    %609 = vmatpush1.msra.mxu0 0.0
    %610 = vmatprep.subr.mxu0 0.0
    %611 = vmatpush1.msra.mxu0 0.0
    %612 = vmatprep.subr.mxu0 0.0
    %613 = vmatpush1.msra.mxu0 0.0
    %614 = vmatprep.subr.mxu0 0.0
    %615 = vmatpush1.msra.mxu0 0.0
    %616 = vmatprep.subr.mxu0 0.0
    %617 = vmatpush1.msra.mxu0 0.0
    %618 = vmatprep.subr.mxu0 0.0
    %619 = vmatpush1.msra.mxu0 0.0
    %620 = vmatprep.subr.mxu0 0.0
    %621 = vmatpush1.msra.mxu0 0.0
    %622 = vmatprep.subr.mxu0 0.0
    %623 = vmatpush1.msra.mxu0 0.0
    %624 = vmatprep.subr.mxu0 0.0
    %625 = vmatpush1.msra.mxu0 0.0
    %626 = vmatprep.subr.mxu0 0.0
    %627 = vmatpush1.msra.mxu0 0.0
    %628 = vmatprep.subr.mxu0 0.0
    %629 = vmatpush1.msra.mxu0 0.0
    %630 = vmatprep.subr.mxu0 0.0
    %631 = vmatpush1.msra.mxu0 0.0
    %632 = vmatprep.subr.mxu0 0.0
    %633 = vmatpush1.msra.mxu0 0.0
    %634 = vmatprep.subr.mxu0 0.0
    %635 = vmatpush1.msra.mxu0 0.0
    %636 = vmatprep.subr.mxu0 0.0
    %637 = vmatpush1.msra.mxu0 0.0
    %638 = vmatprep.subr.mxu0 0.0
    %639 = vmatpush1.msra.mxu0 0.0
    %640 = vmatprep.subr.mxu0 0.0
    %641 = vmatpush1.msra.mxu0 0.0
    %642 = vmatprep.subr.mxu0 0.0
    %643 = vmatpush1.msra.mxu0 0.0
    %644 = vmatprep.subr.mxu0 0.0
    %645 = vmatpush1.msra.mxu0 0.0
    %646 = vmatprep.subr.mxu0 0.0
    %647 = vmatpush1.msra.mxu0 0.0
    %648 = vmatprep.subr.mxu0 0.0
    %649 = vmatpush1.msra.mxu0 0.0
    %650 = vmatprep.subr.mxu0 0.0
    %651 = vmatpush1.msra.mxu0 0.0
    %652 = vmatprep.subr.mxu0 0.0
    %653 = vmatpush1.msra.mxu0 0.0
    %654 = vmatprep.subr.mxu0 0.0
    %655 = vmatpush1.msra.mxu0 0.0
    %656 = vmatprep.subr.mxu0 0.0
    %657 = vmatpush1.msra.mxu0 0.0
    %658 = vmatprep.subr.mxu0 0.0
    %659 = vmatpush1.msra.mxu0 0.0
    %660 = vmatprep.subr.mxu0 0.0
    %661 = vmatpush1.msra.mxu0 0.0
    %662 = vmatprep.mubr.f32.mxu0 0.0
    %663 = vmatmul.mubr.f32.gmra.mrb[0].mxu0 %v593
    %v664 = vpop.f32.mrb[0].mxu0
    %v665 = vadd.f32 0.0, %v664
    %v666 = vpop.f32.mrb[0].mxu0
    %667 = vmatprep.mubr.f32.mxu0 0.0
    %668 = vmatmul.mubr.f32.gmra.mrb[0].mxu0 %v596
    %v669 = vpop.f32.mrb[0].mxu0
    %v670 = vadd.f32 0.0, %v669
    %v671 = vpop.f32.mrb[0].mxu0
    %672 = vdwg.mxu0
    %673 = vset.pattern.permute.xlu0 7
    %674 = vperm.xlu0 %673, %v210
    %v675 = vpop.permute.xlu0 %674
    %677 = vset.pattern.permute.xlu0 7
    %678 = vperm.xlu0 %677, %v215
    %v679 = vpop.permute.xlu0 %678
    %681 = vset.pattern.permute.xlu0 3
    %682 = vperm.xlu0 %681, %v210
    %v683 = vpop.permute.xlu0 %682
    %684 = vset.pattern.permute.xlu0 3
    %685 = vperm.xlu0 %684, %v215
    %v686 = vpop.permute.xlu0 %685
    %v687 = vlaneseq
    %v688 = vshrl.u32 %v687, 7
    %v689 = vsub.s32 %v235, %v688
    %v690 = vrot.slane %v683, %v689
    %v691 = vlaneseq
    %v692 = vshrl.u32 %v691, 7
    %v693 = vsub.s32 %v240, %v692
    %v694 = vrot.slane %v686, %v693
    %v695 = vsel %vm245, %v694, %v690
    %v696 = vsel %vm247, %v695, %v695
    %v697 = vsel %vm249, %v695, %v696
    %v698 = vsel %vm251, %v695, %v697
    %v699 = vsel %vm253, %v695, %v698
    %v700 = vsel %vm255, %v695, %v699
    %v701 = vsel %vm257, %v695, %v700
    %v703 = vadd.f32 %v675, %v701
    %v704 = vadd.f32 %v679, %v701
    %vm705 = vcmp.gt.f32.partialorder %v703, 0.0
    %vm706 = vcmp.gt.f32.partialorder %v704, 0.0
    %v707 = vmul.f32 %v703, 0.2
    %v708 = vmul.f32 %v704, 0.2
    %v709 = vsel %vm705, %v703, %v707
    %v710 = vsel %vm706, %v704, %v708
    %v711 = vsel %vm268, %v709, -1e+30
    %v712 = vsel %vm269, %v710, -1e+30
    %v713 = vsel %vm54, %v711, -inf
    %714 = vmax.xlane.f32.xlu0 %v713
    %v715 = vpop.xlane.xlu0 %714
    %v716 = vsel %vm54, %v712, -inf
    %717 = vmax.xlane.f32.xlu0 %v716
    %v718 = vpop.xlane.xlu0 %717
    %v719 = vsub.f32 %v711, %v715
    %v720 = vsub.f32 %v712, %v718
    %v721 = vmul.f32 %v719, 1.442695
    %v722 = vpow.pop %v721
    %v723 = vmul.f32 %v720, 1.442695
    %v724 = vpow.pop %v723
    %v725 = vsel %vm54, %v722, 0.0
    %726 = vadd.xlane.f32.xlu0 %v725
    %v727 = vpop.xlane.xlu0 %726
    %v728 = vsel %vm54, %v724, 0.0
    %729 = vadd.xlane.f32.xlu0 %v728
    %v730 = vpop.xlane.xlu0 %729
    %v731 = vrcp.pop %v727
    %v732 = vrcp.pop %v730
    %v733 = vmul.f32 %v722, %v731
    %v734 = vmul.f32 %v724, %v732
    %735 = vrot.lane.b32.xlu0 %v128, 104
    %v736 = vpop.permute.xlu0 %735
    %737 = vrot.lane.b32.xlu0 %v133, 104
    %v738 = vpop.permute.xlu0 %737
    %v742 = vsel %vm54, %v733, 0
    %v745 = vsel %vm54, %v734, 0
    %747 = vmatprep.subr.mxu0 0.0
    %748 = vmatpush1.msra.mxu0 %v736
    %749 = vmatprep.subr.mxu0 0.0
    %750 = vmatpush1.msra.mxu0 %v738
    %751 = vmatprep.subr.mxu0 0.0
    %752 = vmatpush1.msra.mxu0 0.0
    %753 = vmatprep.subr.mxu0 0.0
    %754 = vmatpush1.msra.mxu0 0.0
    %755 = vmatprep.subr.mxu0 0.0
    %756 = vmatpush1.msra.mxu0 0.0
    %757 = vmatprep.subr.mxu0 0.0
    %758 = vmatpush1.msra.mxu0 0.0
    %759 = vmatprep.subr.mxu0 0.0
    %760 = vmatpush1.msra.mxu0 0.0
    %761 = vmatprep.subr.mxu0 0.0
    %762 = vmatpush1.msra.mxu0 0.0
    %763 = vmatprep.subr.mxu0 0.0
    %764 = vmatpush1.msra.mxu0 0.0
    %765 = vmatprep.subr.mxu0 0.0
    %766 = vmatpush1.msra.mxu0 0.0
    %767 = vmatprep.subr.mxu0 0.0
    %768 = vmatpush1.msra.mxu0 0.0
    %769 = vmatprep.subr.mxu0 0.0
    %770 = vmatpush1.msra.mxu0 0.0
    %771 = vmatprep.subr.mxu0 0.0
    %772 = vmatpush1.msra.mxu0 0.0
    %773 = vmatprep.subr.mxu0 0.0
    %774 = vmatpush1.msra.mxu0 0.0
    %775 = vmatprep.subr.mxu0 0.0
    %776 = vmatpush1.msra.mxu0 0.0
    %777 = vmatprep.subr.mxu0 0.0
    %778 = vmatpush1.msra.mxu0 0.0
    %779 = vmatprep.subr.mxu0 0.0
    %780 = vmatpush1.msra.mxu0 0.0
    %781 = vmatprep.subr.mxu0 0.0
    %782 = vmatpush1.msra.mxu0 0.0
    %783 = vmatprep.subr.mxu0 0.0
    %784 = vmatpush1.msra.mxu0 0.0
    %785 = vmatprep.subr.mxu0 0.0
    %786 = vmatpush1.msra.mxu0 0.0
    %787 = vmatprep.subr.mxu0 0.0
    %788 = vmatpush1.msra.mxu0 0.0
    %789 = vmatprep.subr.mxu0 0.0
    %790 = vmatpush1.msra.mxu0 0.0
    %791 = vmatprep.subr.mxu0 0.0
    %792 = vmatpush1.msra.mxu0 0.0
    %793 = vmatprep.subr.mxu0 0.0
    %794 = vmatpush1.msra.mxu0 0.0
    %795 = vmatprep.subr.mxu0 0.0
    %796 = vmatpush1.msra.mxu0 0.0
    %797 = vmatprep.subr.mxu0 0.0
    %798 = vmatpush1.msra.mxu0 0.0
    %799 = vmatprep.subr.mxu0 0.0
    %800 = vmatpush1.msra.mxu0 0.0
    %801 = vmatprep.subr.mxu0 0.0
    %802 = vmatpush1.msra.mxu0 0.0
    %803 = vmatprep.subr.mxu0 0.0
    %804 = vmatpush1.msra.mxu0 0.0
    %805 = vmatprep.subr.mxu0 0.0
    %806 = vmatpush1.msra.mxu0 0.0
    %807 = vmatprep.subr.mxu0 0.0
    %808 = vmatpush1.msra.mxu0 0.0
    %809 = vmatprep.subr.mxu0 0.0
    %810 = vmatpush1.msra.mxu0 0.0
    %811 = vmatprep.mubr.f32.mxu0 0.0
    %812 = vmatmul.mubr.f32.gmra.mrb[0].mxu0 %v742
    %v813 = vpop.f32.mrb[0].mxu0
    %v814 = vadd.f32 0.0, %v813
    %v815 = vpop.f32.mrb[0].mxu0
    %816 = vmatprep.mubr.f32.mxu0 0.0
    %817 = vmatmul.mubr.f32.gmra.mrb[0].mxu0 %v745
    %v818 = vpop.f32.mrb[0].mxu0
    %v819 = vadd.f32 0.0, %v818
    %v820 = vpop.f32.mrb[0].mxu0
    %821 = vdwg.mxu0
    %824 = vrot.lane.b32.xlu0 %v516, 8
    %v825 = vpop.permute.xlu0 %824
    %826 = vrot.lane.b32.xlu0 %v521, 8
    %v827 = vpop.permute.xlu0 %826
    %832 = vrot.lane.b32.xlu0 %v665, 16
    %v833 = vpop.permute.xlu0 %832
    %834 = vrot.lane.b32.xlu0 %v670, 16
    %v835 = vpop.permute.xlu0 %834
    %840 = vrot.lane.b32.xlu0 %v814, 24
    %v841 = vpop.permute.xlu0 %840
    %842 = vrot.lane.b32.xlu0 %v819, 24
    %v843 = vpop.permute.xlu0 %842
    %vm846 = vcmask 64512
    %v847 = vsel %vm846, %v367, %v825
    %v848 = vsel %vm846, %v372, %v827
    %v849 = vsel %vm54, %v847, %v833
    %v850 = vsel %vm54, %v848, %v835
    %vm851 = vcmask 195584
    %v852 = vsel %vm851, %v849, %v841
    %v853 = vsel %vm851, %v850, %v843
    %v854 = vld [vmem:[%s4] sm:$0x1]
    %v856 = vlaneseq
    %v857 = vshrl.u32 %v856, 7
    %v858 = vsub.s32 0, %v857
    %v859 = vrot.slane %v854, %v858
    %v861 = vadd.f32 %v852, %v859
    %v862 = vadd.f32 %v853, %v859
    %v863 = vld [vmem:[%s5] sm:$0x1]
    %v864 = vld [vmem:[%s6] sm:$0x1]
    %v865 = vsel %vm136, %v861, 0.0
    %866 = vadd.xlane.f32.xlu0 %v865
    %v867 = vpop.xlane.xlu0 %866
    %v868 = vsel %vm136, %v862, 0.0
    %869 = vadd.xlane.f32.xlu0 %v868
    %v870 = vpop.xlane.xlu0 %869
    %v871 = vrcp.pop 32.0
    %v872 = vmul.f32 %v867, %v871
    %v873 = vmul.f32 %v870, %v871
    %v874 = vsub.f32 %v861, %v872
    %v875 = vsub.f32 %v862, %v873
    %v876 = vmul.f32 %v874, %v874
    %v877 = vmul.f32 %v875, %v875
    %v878 = vsel %vm136, %v876, 0.0
    %879 = vadd.xlane.f32.xlu0 %v878
    %v880 = vpop.xlane.xlu0 %879
    %v881 = vsel %vm136, %v877, 0.0
    %882 = vadd.xlane.f32.xlu0 %v881
    %v883 = vpop.xlane.xlu0 %882
    %v884 = vmul.f32 %v880, %v871
    %v885 = vmul.f32 %v883, %v871
    %v886 = vadd.f32 %v884, 1e-05
    %v887 = vadd.f32 %v885, 1e-05
    %v888 = vrsqrt.pop %v886
    %v889 = vrsqrt.pop %v887
    %v890 = vmul.f32 %v874, %v888
    %v891 = vmul.f32 %v875, %v889
    %v893 = vlaneseq
    %v894 = vshrl.u32 %v893, 7
    %v895 = vsub.s32 0, %v894
    %v896 = vrot.slane %v863, %v895
    %v898 = vmul.f32 %v890, %v896
    %v899 = vmul.f32 %v891, %v896
    %v901 = vlaneseq
    %v902 = vshrl.u32 %v901, 7
    %v903 = vsub.s32 0, %v902
    %v904 = vrot.slane %v864, %v903
    %v906 = vadd.f32 %v898, %v904
    %v907 = vadd.f32 %v899, %v904
    %vm908 = vcmp.gt.f32.partialorder %v906, 0.0
    %vm909 = vcmp.gt.f32.partialorder %v907, 0.0
    %v910 = vmin.f32 %v906, 0.0
    %v911 = vmin.f32 %v907, 0.0
    %v912 = vmul.f32 %v910, 1.442695
    %v913 = vpow.pop %v912
    %v914 = vmul.f32 %v911, 1.442695
    %v915 = vpow.pop %v914
    %v916 = vsub.f32 %v913, 1.0
    %v917 = vsub.f32 %v915, 1.0
    %v918 = vsel %vm908, %v906, %v916
    %v919 = vsel %vm909, %v907, %v917
    %v920 = vld [vmem:[%s7] sm:$0xff]
    %v921 = vld [vmem:[%s7 + $0x8] sm:$0xff]
    %v922 = vld [vmem:[%s7 + $0x10] sm:$0xff]
    %v923 = vld [vmem:[%s7 + $0x18] sm:$0xff]
    %v924 = vld [vmem:[%s8] sm:$0xff]
    %v926 = vsel %vm136, %v918, 0
    %v929 = vsel %vm136, %v919, 0
    %931 = vmatprep.subr.mxu0 0.0
    %932 = vmatpush1.msra.mxu0 %v920
    %933 = vmatprep.subr.mxu0 0.0
    %934 = vmatpush1.msra.mxu0 %v921
    %935 = vmatprep.subr.mxu0 0.0
    %936 = vmatpush1.msra.mxu0 %v922
    %937 = vmatprep.subr.mxu0 0.0
    %938 = vmatpush1.msra.mxu0 %v923
    %939 = vmatprep.subr.mxu0 0.0
    %940 = vmatpush1.msra.mxu0 0.0
    %941 = vmatprep.subr.mxu0 0.0
    %942 = vmatpush1.msra.mxu0 0.0
    %943 = vmatprep.subr.mxu0 0.0
    %944 = vmatpush1.msra.mxu0 0.0
    %945 = vmatprep.subr.mxu0 0.0
    %946 = vmatpush1.msra.mxu0 0.0
    %947 = vmatprep.subr.mxu0 0.0
    %948 = vmatpush1.msra.mxu0 0.0
    %949 = vmatprep.subr.mxu0 0.0
    %950 = vmatpush1.msra.mxu0 0.0
    %951 = vmatprep.subr.mxu0 0.0
    %952 = vmatpush1.msra.mxu0 0.0
    %953 = vmatprep.subr.mxu0 0.0
    %954 = vmatpush1.msra.mxu0 0.0
    %955 = vmatprep.subr.mxu0 0.0
    %956 = vmatpush1.msra.mxu0 0.0
    %957 = vmatprep.subr.mxu0 0.0
    %958 = vmatpush1.msra.mxu0 0.0
    %959 = vmatprep.subr.mxu0 0.0
    %960 = vmatpush1.msra.mxu0 0.0
    %961 = vmatprep.subr.mxu0 0.0
    %962 = vmatpush1.msra.mxu0 0.0
    %963 = vmatprep.subr.mxu0 0.0
    %964 = vmatpush1.msra.mxu0 0.0
    %965 = vmatprep.subr.mxu0 0.0
    %966 = vmatpush1.msra.mxu0 0.0
    %967 = vmatprep.subr.mxu0 0.0
    %968 = vmatpush1.msra.mxu0 0.0
    %969 = vmatprep.subr.mxu0 0.0
    %970 = vmatpush1.msra.mxu0 0.0
    %971 = vmatprep.subr.mxu0 0.0
    %972 = vmatpush1.msra.mxu0 0.0
    %973 = vmatprep.subr.mxu0 0.0
    %974 = vmatpush1.msra.mxu0 0.0
    %975 = vmatprep.subr.mxu0 0.0
    %976 = vmatpush1.msra.mxu0 0.0
    %977 = vmatprep.subr.mxu0 0.0
    %978 = vmatpush1.msra.mxu0 0.0
    %979 = vmatprep.subr.mxu0 0.0
    %980 = vmatpush1.msra.mxu0 0.0
    %981 = vmatprep.subr.mxu0 0.0
    %982 = vmatpush1.msra.mxu0 0.0
    %983 = vmatprep.subr.mxu0 0.0
    %984 = vmatpush1.msra.mxu0 0.0
    %985 = vmatprep.subr.mxu0 0.0
    %986 = vmatpush1.msra.mxu0 0.0
    %987 = vmatprep.subr.mxu0 0.0
    %988 = vmatpush1.msra.mxu0 0.0
    %989 = vmatprep.subr.mxu0 0.0
    %990 = vmatpush1.msra.mxu0 0.0
    %991 = vmatprep.subr.mxu0 0.0
    %992 = vmatpush1.msra.mxu0 0.0
    %993 = vmatprep.subr.mxu0 0.0
    %994 = vmatpush1.msra.mxu0 0.0
    %995 = vmatprep.mubr.f32.mxu0 0.0
    %996 = vmatmul.mubr.f32.gmra.mrb[0].mxu0 %v926
    %v997 = vpop.f32.mrb[0].mxu0
    %v998 = vadd.f32 0.0, %v997
    %v999 = vpop.f32.mrb[0].mxu0
    %1000 = vmatprep.mubr.f32.mxu0 0.0
    %1001 = vmatmul.mubr.f32.gmra.mrb[0].mxu0 %v929
    %v1002 = vpop.f32.mrb[0].mxu0
    %v1003 = vadd.f32 0.0, %v1002
    %v1004 = vpop.f32.mrb[0].mxu0
    %1005 = vdwg.mxu0
    %v1007 = vsel %vm846, %v998, 0
    %v1010 = vsel %vm846, %v1003, 0
    %1012 = vmatprep.subr.mxu0 0.0
    %1013 = vmatpush1.msra.mxu0 %v924
    %1014 = vmatprep.subr.mxu0 0.0
    %1015 = vmatpush1.msra.mxu0 0.0
    %1016 = vmatprep.subr.mxu0 0.0
    %1017 = vmatpush1.msra.mxu0 0.0
    %1018 = vmatprep.subr.mxu0 0.0
    %1019 = vmatpush1.msra.mxu0 0.0
    %1020 = vmatprep.subr.mxu0 0.0
    %1021 = vmatpush1.msra.mxu0 0.0
    %1022 = vmatprep.subr.mxu0 0.0
    %1023 = vmatpush1.msra.mxu0 0.0
    %1024 = vmatprep.subr.mxu0 0.0
    %1025 = vmatpush1.msra.mxu0 0.0
    %1026 = vmatprep.subr.mxu0 0.0
    %1027 = vmatpush1.msra.mxu0 0.0
    %1028 = vmatprep.subr.mxu0 0.0
    %1029 = vmatpush1.msra.mxu0 0.0
    %1030 = vmatprep.subr.mxu0 0.0
    %1031 = vmatpush1.msra.mxu0 0.0
    %1032 = vmatprep.subr.mxu0 0.0
    %1033 = vmatpush1.msra.mxu0 0.0
    %1034 = vmatprep.subr.mxu0 0.0
    %1035 = vmatpush1.msra.mxu0 0.0
    %1036 = vmatprep.subr.mxu0 0.0
    %1037 = vmatpush1.msra.mxu0 0.0
    %1038 = vmatprep.subr.mxu0 0.0
    %1039 = vmatpush1.msra.mxu0 0.0
    %1040 = vmatprep.subr.mxu0 0.0
    %1041 = vmatpush1.msra.mxu0 0.0
    %1042 = vmatprep.subr.mxu0 0.0
    %1043 = vmatpush1.msra.mxu0 0.0
    %1044 = vmatprep.subr.mxu0 0.0
    %1045 = vmatpush1.msra.mxu0 0.0
    %1046 = vmatprep.subr.mxu0 0.0
    %1047 = vmatpush1.msra.mxu0 0.0
    %1048 = vmatprep.subr.mxu0 0.0
    %1049 = vmatpush1.msra.mxu0 0.0
    %1050 = vmatprep.subr.mxu0 0.0
    %1051 = vmatpush1.msra.mxu0 0.0
    %1052 = vmatprep.subr.mxu0 0.0
    %1053 = vmatpush1.msra.mxu0 0.0
    %1054 = vmatprep.subr.mxu0 0.0
    %1055 = vmatpush1.msra.mxu0 0.0
    %1056 = vmatprep.subr.mxu0 0.0
    %1057 = vmatpush1.msra.mxu0 0.0
    %1058 = vmatprep.subr.mxu0 0.0
    %1059 = vmatpush1.msra.mxu0 0.0
    %1060 = vmatprep.subr.mxu0 0.0
    %1061 = vmatpush1.msra.mxu0 0.0
    %1062 = vmatprep.subr.mxu0 0.0
    %1063 = vmatpush1.msra.mxu0 0.0
    %1064 = vmatprep.subr.mxu0 0.0
    %1065 = vmatpush1.msra.mxu0 0.0
    %1066 = vmatprep.subr.mxu0 0.0
    %1067 = vmatpush1.msra.mxu0 0.0
    %1068 = vmatprep.subr.mxu0 0.0
    %1069 = vmatpush1.msra.mxu0 0.0
    %1070 = vmatprep.subr.mxu0 0.0
    %1071 = vmatpush1.msra.mxu0 0.0
    %1072 = vmatprep.subr.mxu0 0.0
    %1073 = vmatpush1.msra.mxu0 0.0
    %1074 = vmatprep.subr.mxu0 0.0
    %1075 = vmatpush1.msra.mxu0 0.0
    %1076 = vmatprep.mubr.f32.mxu0 0.0
    %1077 = vmatmul.mubr.f32.gmra.mrb[0].mxu0 %v1007
    %v1078 = vpop.f32.mrb[0].mxu0
    %v1079 = vadd.f32 0.0, %v1078
    %v1080 = vpop.f32.mrb[0].mxu0
    %1081 = vmatprep.mubr.f32.mxu0 0.0
    %1082 = vmatmul.mubr.f32.gmra.mrb[0].mxu0 %v1010
    %v1083 = vpop.f32.mrb[0].mxu0
    %v1084 = vadd.f32 0.0, %v1083
    %v1085 = vpop.f32.mrb[0].mxu0
    %1086 = vdwg.mxu0
    %1088 = vset.pattern.permute.xlu0 2
    %1089 = vperm.xlu0 %1088, %v1079
    %v1090 = vpop.permute.xlu0 %1089
    %1093 = vset.pattern.permute.xlu0 2
    %1094 = vperm.xlu0 %1093, %v1084
    %v1095 = vpop.permute.xlu0 %1094
    %1097 = vset.pattern.permute.xlu0 0
    %1098 = vperm.xlu0 %1097, %v1079
    %v1099 = vpop.permute.xlu0 %1098
    %1100 = vset.pattern.permute.xlu0 0
    %1101 = vperm.xlu0 %1100, %v1084
    %v1102 = vpop.permute.xlu0 %1101
    %v1103 = vlaneseq
    %v1104 = vshrl.u32 %v1103, 7
    %v1105 = vsub.s32 %v235, %v1104
    %v1106 = vrot.slane %v1099, %v1105
    %v1107 = vlaneseq
    %v1108 = vshrl.u32 %v1107, 7
    %v1109 = vsub.s32 %v240, %v1108
    %v1110 = vrot.slane %v1102, %v1109
    %v1111 = vsel %vm245, %v1110, %v1106
    %v1112 = vsel %vm247, %v1111, %v1111
    %v1113 = vsel %vm249, %v1111, %v1112
    %v1114 = vsel %vm251, %v1111, %v1113
    %v1115 = vsel %vm253, %v1111, %v1114
    %v1116 = vsel %vm255, %v1111, %v1115
    %v1117 = vsel %vm257, %v1111, %v1116
    %v1119 = vadd.f32 %v1090, %v1117
    %v1120 = vadd.f32 %v1095, %v1117
    %vm1121 = vcmp.gt.f32.partialorder %v1119, 0.0
    %vm1122 = vcmp.gt.f32.partialorder %v1120, 0.0
    %v1123 = vmul.f32 %v1119, 0.2
    %v1124 = vmul.f32 %v1120, 0.2
    %v1125 = vsel %vm1121, %v1119, %v1123
    %v1126 = vsel %vm1122, %v1120, %v1124
    %v1127 = vsel %vm268, %v1125, -1e+30
    %v1128 = vsel %vm269, %v1126, -1e+30
    %v1129 = vsel %vm54, %v1127, -inf
    %1130 = vmax.xlane.f32.xlu0 %v1129
    %v1131 = vpop.xlane.xlu0 %1130
    %v1132 = vsel %vm54, %v1128, -inf
    %1133 = vmax.xlane.f32.xlu0 %v1132
    %v1134 = vpop.xlane.xlu0 %1133
    %v1135 = vsub.f32 %v1127, %v1131
    %v1136 = vsub.f32 %v1128, %v1134
    %v1137 = vmul.f32 %v1135, 1.442695
    %v1138 = vpow.pop %v1137
    %v1139 = vmul.f32 %v1136, 1.442695
    %v1140 = vpow.pop %v1139
    %v1141 = vsel %vm54, %v1138, 0.0
    %1142 = vadd.xlane.f32.xlu0 %v1141
    %v1143 = vpop.xlane.xlu0 %1142
    %v1144 = vsel %vm54, %v1140, 0.0
    %1145 = vadd.xlane.f32.xlu0 %v1144
    %v1146 = vpop.xlane.xlu0 %1145
    %v1147 = vrcp.pop %v1143
    %v1148 = vrcp.pop %v1146
    %v1149 = vmul.f32 %v1138, %v1147
    %v1150 = vmul.f32 %v1140, %v1148
    %1151 = vset.pattern.permute.xlu0 3
    %1152 = vperm.xlu0 %1151, %v1079
    %v1153 = vpop.permute.xlu0 %1152
    %1155 = vset.pattern.permute.xlu0 3
    %1156 = vperm.xlu0 %1155, %v1084
    %v1157 = vpop.permute.xlu0 %1156
    %1159 = vset.pattern.permute.xlu0 1
    %1160 = vperm.xlu0 %1159, %v1079
    %v1161 = vpop.permute.xlu0 %1160
    %1162 = vset.pattern.permute.xlu0 1
    %1163 = vperm.xlu0 %1162, %v1084
    %v1164 = vpop.permute.xlu0 %1163
    %v1165 = vlaneseq
    %v1166 = vshrl.u32 %v1165, 7
    %v1167 = vsub.s32 %v235, %v1166
    %v1168 = vrot.slane %v1161, %v1167
    %v1169 = vlaneseq
    %v1170 = vshrl.u32 %v1169, 7
    %v1171 = vsub.s32 %v240, %v1170
    %v1172 = vrot.slane %v1164, %v1171
    %v1173 = vsel %vm245, %v1172, %v1168
    %v1174 = vsel %vm247, %v1173, %v1173
    %v1175 = vsel %vm249, %v1173, %v1174
    %v1176 = vsel %vm251, %v1173, %v1175
    %v1177 = vsel %vm253, %v1173, %v1176
    %v1178 = vsel %vm255, %v1173, %v1177
    %v1179 = vsel %vm257, %v1173, %v1178
    %v1181 = vadd.f32 %v1153, %v1179
    %v1182 = vadd.f32 %v1157, %v1179
    %vm1183 = vcmp.gt.f32.partialorder %v1181, 0.0
    %vm1184 = vcmp.gt.f32.partialorder %v1182, 0.0
    %v1185 = vmul.f32 %v1181, 0.2
    %v1186 = vmul.f32 %v1182, 0.2
    %v1187 = vsel %vm1183, %v1181, %v1185
    %v1188 = vsel %vm1184, %v1182, %v1186
    %v1189 = vsel %vm268, %v1187, -1e+30
    %v1190 = vsel %vm269, %v1188, -1e+30
    %v1191 = vsel %vm54, %v1189, -inf
    %1192 = vmax.xlane.f32.xlu0 %v1191
    %v1193 = vpop.xlane.xlu0 %1192
    %v1194 = vsel %vm54, %v1190, -inf
    %1195 = vmax.xlane.f32.xlu0 %v1194
    %v1196 = vpop.xlane.xlu0 %1195
    %v1197 = vsub.f32 %v1189, %v1193
    %v1198 = vsub.f32 %v1190, %v1196
    %v1199 = vmul.f32 %v1197, 1.442695
    %v1200 = vpow.pop %v1199
    %v1201 = vmul.f32 %v1198, 1.442695
    %v1202 = vpow.pop %v1201
    %v1203 = vsel %vm54, %v1200, 0.0
    %1204 = vadd.xlane.f32.xlu0 %v1203
    %v1205 = vpop.xlane.xlu0 %1204
    %v1206 = vsel %vm54, %v1202, 0.0
    %1207 = vadd.xlane.f32.xlu0 %v1206
    %v1208 = vpop.xlane.xlu0 %1207
    %v1209 = vrcp.pop %v1205
    %v1210 = vrcp.pop %v1208
    %v1211 = vmul.f32 %v1200, %v1209
    %v1212 = vmul.f32 %v1202, %v1210
    %1213 = vrot.lane.b32.xlu0 %v998, 124
    %v1214 = vpop.permute.xlu0 %1213
    %1215 = vrot.lane.b32.xlu0 %v1003, 124
    %v1216 = vpop.permute.xlu0 %1215
    %v1220 = vsel %vm54, %v1211, 0
    %v1223 = vsel %vm54, %v1212, 0
    %1225 = vmatprep.subr.mxu0 0.0
    %1226 = vmatpush1.msra.mxu0 %v1214
    %1227 = vmatprep.subr.mxu0 0.0
    %1228 = vmatpush1.msra.mxu0 %v1216
    %1229 = vmatprep.subr.mxu0 0.0
    %1230 = vmatpush1.msra.mxu0 0.0
    %1231 = vmatprep.subr.mxu0 0.0
    %1232 = vmatpush1.msra.mxu0 0.0
    %1233 = vmatprep.subr.mxu0 0.0
    %1234 = vmatpush1.msra.mxu0 0.0
    %1235 = vmatprep.subr.mxu0 0.0
    %1236 = vmatpush1.msra.mxu0 0.0
    %1237 = vmatprep.subr.mxu0 0.0
    %1238 = vmatpush1.msra.mxu0 0.0
    %1239 = vmatprep.subr.mxu0 0.0
    %1240 = vmatpush1.msra.mxu0 0.0
    %1241 = vmatprep.subr.mxu0 0.0
    %1242 = vmatpush1.msra.mxu0 0.0
    %1243 = vmatprep.subr.mxu0 0.0
    %1244 = vmatpush1.msra.mxu0 0.0
    %1245 = vmatprep.subr.mxu0 0.0
    %1246 = vmatpush1.msra.mxu0 0.0
    %1247 = vmatprep.subr.mxu0 0.0
    %1248 = vmatpush1.msra.mxu0 0.0
    %1249 = vmatprep.subr.mxu0 0.0
    %1250 = vmatpush1.msra.mxu0 0.0
    %1251 = vmatprep.subr.mxu0 0.0
    %1252 = vmatpush1.msra.mxu0 0.0
    %1253 = vmatprep.subr.mxu0 0.0
    %1254 = vmatpush1.msra.mxu0 0.0
    %1255 = vmatprep.subr.mxu0 0.0
    %1256 = vmatpush1.msra.mxu0 0.0
    %1257 = vmatprep.subr.mxu0 0.0
    %1258 = vmatpush1.msra.mxu0 0.0
    %1259 = vmatprep.subr.mxu0 0.0
    %1260 = vmatpush1.msra.mxu0 0.0
    %1261 = vmatprep.subr.mxu0 0.0
    %1262 = vmatpush1.msra.mxu0 0.0
    %1263 = vmatprep.subr.mxu0 0.0
    %1264 = vmatpush1.msra.mxu0 0.0
    %1265 = vmatprep.subr.mxu0 0.0
    %1266 = vmatpush1.msra.mxu0 0.0
    %1267 = vmatprep.subr.mxu0 0.0
    %1268 = vmatpush1.msra.mxu0 0.0
    %1269 = vmatprep.subr.mxu0 0.0
    %1270 = vmatpush1.msra.mxu0 0.0
    %1271 = vmatprep.subr.mxu0 0.0
    %1272 = vmatpush1.msra.mxu0 0.0
    %1273 = vmatprep.subr.mxu0 0.0
    %1274 = vmatpush1.msra.mxu0 0.0
    %1275 = vmatprep.subr.mxu0 0.0
    %1276 = vmatpush1.msra.mxu0 0.0
    %1277 = vmatprep.subr.mxu0 0.0
    %1278 = vmatpush1.msra.mxu0 0.0
    %1279 = vmatprep.subr.mxu0 0.0
    %1280 = vmatpush1.msra.mxu0 0.0
    %1281 = vmatprep.subr.mxu0 0.0
    %1282 = vmatpush1.msra.mxu0 0.0
    %1283 = vmatprep.subr.mxu0 0.0
    %1284 = vmatpush1.msra.mxu0 0.0
    %1285 = vmatprep.subr.mxu0 0.0
    %1286 = vmatpush1.msra.mxu0 0.0
    %1287 = vmatprep.subr.mxu0 0.0
    %1288 = vmatpush1.msra.mxu0 0.0
    %1289 = vmatprep.mubr.f32.mxu0 0.0
    %1290 = vmatmul.mubr.f32.gmra.mrb[0].mxu0 %v1220
    %v1291 = vpop.f32.mrb[0].mxu0
    %v1292 = vadd.f32 0.0, %v1291
    %v1293 = vpop.f32.mrb[0].mxu0
    %1294 = vmatprep.mubr.f32.mxu0 0.0
    %1295 = vmatmul.mubr.f32.gmra.mrb[0].mxu0 %v1223
    %v1296 = vpop.f32.mrb[0].mxu0
    %v1297 = vadd.f32 0.0, %v1296
    %v1298 = vpop.f32.mrb[0].mxu0
    %1299 = vdwg.mxu0
    %v1301 = vsel %vm54, %v1149, 0
    %v1304 = vsel %vm54, %v1150, 0
    %1306 = vmatprep.subr.mxu0 0.0
    %1307 = vmatpush1.msra.mxu0 %v998
    %1308 = vmatprep.subr.mxu0 0.0
    %1309 = vmatpush1.msra.mxu0 %v1003
    %1310 = vmatprep.subr.mxu0 0.0
    %1311 = vmatpush1.msra.mxu0 0.0
    %1312 = vmatprep.subr.mxu0 0.0
    %1313 = vmatpush1.msra.mxu0 0.0
    %1314 = vmatprep.subr.mxu0 0.0
    %1315 = vmatpush1.msra.mxu0 0.0
    %1316 = vmatprep.subr.mxu0 0.0
    %1317 = vmatpush1.msra.mxu0 0.0
    %1318 = vmatprep.subr.mxu0 0.0
    %1319 = vmatpush1.msra.mxu0 0.0
    %1320 = vmatprep.subr.mxu0 0.0
    %1321 = vmatpush1.msra.mxu0 0.0
    %1322 = vmatprep.subr.mxu0 0.0
    %1323 = vmatpush1.msra.mxu0 0.0
    %1324 = vmatprep.subr.mxu0 0.0
    %1325 = vmatpush1.msra.mxu0 0.0
    %1326 = vmatprep.subr.mxu0 0.0
    %1327 = vmatpush1.msra.mxu0 0.0
    %1328 = vmatprep.subr.mxu0 0.0
    %1329 = vmatpush1.msra.mxu0 0.0
    %1330 = vmatprep.subr.mxu0 0.0
    %1331 = vmatpush1.msra.mxu0 0.0
    %1332 = vmatprep.subr.mxu0 0.0
    %1333 = vmatpush1.msra.mxu0 0.0
    %1334 = vmatprep.subr.mxu0 0.0
    %1335 = vmatpush1.msra.mxu0 0.0
    %1336 = vmatprep.subr.mxu0 0.0
    %1337 = vmatpush1.msra.mxu0 0.0
    %1338 = vmatprep.subr.mxu0 0.0
    %1339 = vmatpush1.msra.mxu0 0.0
    %1340 = vmatprep.subr.mxu0 0.0
    %1341 = vmatpush1.msra.mxu0 0.0
    %1342 = vmatprep.subr.mxu0 0.0
    %1343 = vmatpush1.msra.mxu0 0.0
    %1344 = vmatprep.subr.mxu0 0.0
    %1345 = vmatpush1.msra.mxu0 0.0
    %1346 = vmatprep.subr.mxu0 0.0
    %1347 = vmatpush1.msra.mxu0 0.0
    %1348 = vmatprep.subr.mxu0 0.0
    %1349 = vmatpush1.msra.mxu0 0.0
    %1350 = vmatprep.subr.mxu0 0.0
    %1351 = vmatpush1.msra.mxu0 0.0
    %1352 = vmatprep.subr.mxu0 0.0
    %1353 = vmatpush1.msra.mxu0 0.0
    %1354 = vmatprep.subr.mxu0 0.0
    %1355 = vmatpush1.msra.mxu0 0.0
    %1356 = vmatprep.subr.mxu0 0.0
    %1357 = vmatpush1.msra.mxu0 0.0
    %1358 = vmatprep.subr.mxu0 0.0
    %1359 = vmatpush1.msra.mxu0 0.0
    %1360 = vmatprep.subr.mxu0 0.0
    %1361 = vmatpush1.msra.mxu0 0.0
    %1362 = vmatprep.subr.mxu0 0.0
    %1363 = vmatpush1.msra.mxu0 0.0
    %1364 = vmatprep.subr.mxu0 0.0
    %1365 = vmatpush1.msra.mxu0 0.0
    %1366 = vmatprep.subr.mxu0 0.0
    %1367 = vmatpush1.msra.mxu0 0.0
    %1368 = vmatprep.subr.mxu0 0.0
    %1369 = vmatpush1.msra.mxu0 0.0
    %1370 = vmatprep.mubr.f32.mxu0 0.0
    %1371 = vmatmul.mubr.f32.gmra.mrb[0].mxu0 %v1301
    %v1372 = vpop.f32.mrb[0].mxu0
    %v1373 = vadd.f32 %v1292, %v1372
    %v1374 = vpop.f32.mrb[0].mxu0
    %1375 = vmatprep.mubr.f32.mxu0 0.0
    %1376 = vmatmul.mubr.f32.gmra.mrb[0].mxu0 %v1304
    %v1377 = vpop.f32.mrb[0].mxu0
    %v1378 = vadd.f32 %v1297, %v1377
    %v1379 = vpop.f32.mrb[0].mxu0
    %1380 = vdwg.mxu0
    %v1381 = vmul.f32 %v1373, 0.5
    %v1382 = vmul.f32 %v1378, 0.5
    %v1383 = vld [vmem:[%s9] sm:$0x1]
    %v1385 = vlaneseq
    %v1386 = vshrl.u32 %v1385, 7
    %v1387 = vsub.s32 0, %v1386
    %v1388 = vrot.slane %v1383, %v1387
    %v1390 = vadd.f32 %v1381, %v1388
    %v1391 = vadd.f32 %v1382, %v1388
    %v1392 = vld [vmem:[%s10] sm:$0x1]
    %v1393 = vld [vmem:[%s11] sm:$0x1]
    %vm1394 = vcmask 31744
    %v1395 = vsel %vm1394, %v1390, 0.0
    %1396 = vadd.xlane.f32.xlu0 %v1395
    %v1397 = vpop.xlane.xlu0 %1396
    %v1398 = vsel %vm1394, %v1391, 0.0
    %1399 = vadd.xlane.f32.xlu0 %v1398
    %v1400 = vpop.xlane.xlu0 %1399
    %v1401 = vrcp.pop 4.0
    %v1402 = vmul.f32 %v1397, %v1401
    %v1403 = vmul.f32 %v1400, %v1401
    %v1404 = vsub.f32 %v1390, %v1402
    %v1405 = vsub.f32 %v1391, %v1403
    %v1406 = vmul.f32 %v1404, %v1404
    %v1407 = vmul.f32 %v1405, %v1405
    %v1408 = vsel %vm1394, %v1406, 0.0
    %1409 = vadd.xlane.f32.xlu0 %v1408
    %v1410 = vpop.xlane.xlu0 %1409
    %v1411 = vsel %vm1394, %v1407, 0.0
    %1412 = vadd.xlane.f32.xlu0 %v1411
    %v1413 = vpop.xlane.xlu0 %1412
    %v1414 = vmul.f32 %v1410, %v1401
    %v1415 = vmul.f32 %v1413, %v1401
    %v1416 = vadd.f32 %v1414, 1e-05
    %v1417 = vadd.f32 %v1415, 1e-05
    %v1418 = vrsqrt.pop %v1416
    %v1419 = vrsqrt.pop %v1417
    %v1420 = vmul.f32 %v1404, %v1418
    %v1421 = vmul.f32 %v1405, %v1419
    %v1423 = vlaneseq
    %v1424 = vshrl.u32 %v1423, 7
    %v1425 = vsub.s32 0, %v1424
    %v1426 = vrot.slane %v1392, %v1425
    %v1428 = vmul.f32 %v1420, %v1426
    %v1429 = vmul.f32 %v1421, %v1426
    %v1431 = vlaneseq
    %v1432 = vshrl.u32 %v1431, 7
    %v1433 = vsub.s32 0, %v1432
    %v1434 = vrot.slane %v1393, %v1433
    %v1436 = vadd.f32 %v1428, %v1434
    %v1437 = vadd.f32 %v1429, %v1434
    %1438 = vst.msk [vmem:[%s12] sm:$0xff] %vm1394, %v1436
    %1439 = vst.msk [vmem:[%s12 + $0x8] sm:$0xff] %vm1394, %v1437
    %1440 = vst.msk [vmem:[#allocation2] sm:$0xff] %vm54, %v1149
    %1441 = vst.msk [vmem:[#allocation2 + $0x8] sm:$0xff] %vm54, %v1150
    %s1442 = scalar_lea.vmem [#allocation2], 16
    %1443 = vst.msk [vmem:[%s1442] sm:$0xff] %vm54, %v1211
    %1444 = vst.msk [vmem:[%s1442 + $0x8] sm:$0xff] %vm54, %v1212
    // Predicated region
    $region50: #{gat_forward.1} parent=1 // pred_check
      _
    $region51: #{gat_forward.1} parent=1 // pred_check_branch
      %1446 = sbr.rel (0) target = $region53
    $region52: #{gat_forward.1} parent=1 // pred_region
      _
    $region53: #{gat_forward.1} parent=1 // pred_fallthru
      _
    // Predicated region
    $region54: #{gat_forward.1} parent=1 // pred_check
      _
    $region55: #{gat_forward.1} parent=1 // pred_check_branch
      %1448 = sbr.rel (0) target = $region57
    $region56: #{gat_forward.1} parent=1 // pred_region
      %s1450 = ssub.s32 512, 512
      %1451 = vsyncadd [#allocation3], %s1450
      %s1452 = sshll.u32 [#allocation2], 4
      %s1453 = int_to_ptr.vmem [resolvable:$true] %s1452
      %1458 = dma.vmem_to_hbm [thread:$0]  %s1453, 512, %s13, [#allocation3], 128, 128, 8
    $region57: #{gat_forward.1} parent=1 // pred_fallthru
      _
    // Predicated region
    $region58: #{gat_forward.1} parent=1 // pred_check
      _
    $region59: #{gat_forward.1} parent=1 // pred_check_branch
      %1460 = sbr.rel (0) target = $region61
    $region60: #{gat_forward.1} parent=1 // pred_region
      _
    $region61: #{gat_forward.1} parent=1 // pred_fallthru
      _
    // Predicated region
    $region62: #{gat_forward.1} parent=1 // pred_check
      _
    $region63: #{gat_forward.1} parent=1 // pred_check_branch
      %1462 = sbr.rel (0) target = $region65
    $region64: #{gat_forward.1} parent=1 // pred_region
      %1463 = dma.done [#allocation3], 512
    $region65: #{gat_forward.1} parent=1 // pred_fallthru
      _
    %1464 = vsyncpa [#allocation3], 1

</llo_original>
